<compile_context>
chip_gen: v6e
topology: v6e:2x2x1
jax: 0.10.0
libtpu: 0.0.40
codegen_flags: <defaults>
</compile_context>

<pallas_src>
import jax
import jax.numpy as jnp
from jax import lax
from jax.experimental import pallas as pl
from jax.experimental.pallas import tpu as pltpu

# Scaled-down dims (module defaults are d_model=288, nhead=8, dim_ff=2048).
D_MODEL = 32
NHEAD = 4
HEAD_DIM = D_MODEL // NHEAD
DIM_FF = 64
EPS = 1e-5          # torch.nn.LayerNorm default

SEQ = 16            # N (spatial positions -> sequence length after permute)
BATCH = 2


# ------------------------------ fused kernel -------------------------------

def _encoder_layer_kernel(x_ref, wqkv_ref, bqkv_ref, wo_ref, bo_ref,
                          ln1_g_ref, ln1_b_ref,
                          w1_ref, b1_ref, w2_ref, b2_ref,
                          ln2_g_ref, ln2_b_ref,
                          o_ref):
    # x_ref block is (1, D, N) for the current batch; transpose to (N, D)
    # in-kernel (single small XLU transpose) instead of in the wrapper.
    x = jnp.transpose(x_ref[0])                                     # (N, D)

    # ---- fused QKV projection: one (D, 3D) matmul on the MXU ----
    # (1/sqrt(head_dim) already folded into the Q columns of wqkv / bqkv)
    qkv = jnp.dot(x, wqkv_ref[...],
                  preferred_element_type=jnp.float32) + bqkv_ref[...]
    q = qkv[:, 0 * D_MODEL:1 * D_MODEL]
    k = qkv[:, 1 * D_MODEL:2 * D_MODEL]
    v = qkv[:, 2 * D_MODEL:3 * D_MODEL]

    # ---- multi-head self-attention, fully in-register (static head loop) ----
    heads = []
    for h in range(NHEAD):
        c0 = h * HEAD_DIM
        q_h = q[:, c0:c0 + HEAD_DIM]
        k_h = k[:, c0:c0 + HEAD_DIM]
        v_h = v[:, c0:c0 + HEAD_DIM]
        # contract last dims directly -- no explicit k.T materialization
        s = lax.dot_general(q_h, k_h, (((1,), (1,)), ((), ())),
                            preferred_element_type=jnp.float32)     # (N, N)
        s = s - jnp.max(s, axis=-1, keepdims=True)
        p = jnp.exp(s)
        l = jnp.sum(p, axis=-1, keepdims=True)                      # (N, 1)
        o_h = jnp.dot(p, v_h, preferred_element_type=jnp.float32)   # (N, Hd)
        heads.append(o_h / l)          # deferred softmax normalization (N,Hd)

    # single output projection for all heads: (N, D) x (D, D)
    o_cat = jnp.concatenate(heads, axis=-1)                         # (N, D)
    attn = jnp.dot(o_cat, wo_ref[...],
                   preferred_element_type=jnp.float32) + bo_ref[...]

    # ---- residual + LayerNorm 1 ----
    y = x + attn
    mean = jnp.mean(y, axis=-1, keepdims=True)
    var = jnp.mean(jnp.square(y - mean), axis=-1, keepdims=True)
    y = (y - mean) * lax.rsqrt(var + EPS) * ln1_g_ref[...] + ln1_b_ref[...]

    # ---- FFN: linear1 -> ReLU -> linear2 (hidden stays in vregs) ----
    hdn = jnp.dot(y, w1_ref[...], preferred_element_type=jnp.float32) + b1_ref[...]
    hdn = jnp.maximum(hdn, 0.0)
    f = jnp.dot(hdn, w2_ref[...], preferred_element_type=jnp.float32) + b2_ref[...]

    # ---- residual + LayerNorm 2 ----
    z = y + f
    mean = jnp.mean(z, axis=-1, keepdims=True)
    var = jnp.mean(jnp.square(z - mean), axis=-1, keepdims=True)
    z = (z - mean) * lax.rsqrt(var + EPS) * ln2_g_ref[...] + ln2_b_ref[...]

    # write back in channels-first (D, N) form -- no wrapper transpose needed
    o_ref[0] = jnp.transpose(z)


# ------------------------------ JAX wrappers --------------------------------

_PARAM_ORDER = ("wqkv", "bqkv", "wo", "bo", "ln1_g", "ln1_b",
                "w1", "b1", "w2", "b2", "ln2_g", "ln2_b")


@jax.jit
def encoder_layer_forward(src, p):
    """src: (B, D, N) channels-first, exactly like the PyTorch module input.

    `p` must be the kernel params (with the Q scale already folded into
    wqkv/bqkv -- see fold_q_scale)."""
    B, D, N = src.shape
    in_specs = [pl.BlockSpec((1, D, N), lambda b: (b, 0, 0))]
    in_specs += [pl.BlockSpec(p[name].shape, lambda b: (0, 0))
                 for name in _PARAM_ORDER]
    return pl.pallas_call(
        _encoder_layer_kernel,
        out_shape=jax.ShapeDtypeStruct((B, D, N), jnp.float32),
        grid=(B,),
        in_specs=in_specs,
        out_specs=pl.BlockSpec((1, D, N), lambda b: (b, 0, 0)),
        compiler_params=pltpu.CompilerParams(
            dimension_semantics=("parallel",)),
    )(src, *[p[name] for name in _PARAM_ORDER])


def encoder_layer_reference(src, p):
    """Pure-JAX reference (original math, un-folded params) for correctness."""
    B, D, N = src.shape
    x = jnp.transpose(src, (0, 2, 1)).reshape(B * N, D)
    qkv = x @ p["wqkv"] + p["bqkv"]
    q, k, v = qkv[:, :D], qkv[:, D:2 * D], qkv[:, 2 * D:]
    q = q * (HEAD_DIM ** -0.5)

    def split(t):
        return t.reshape(B, N, NHEAD, HEAD_DIM).transpose(0, 2, 1, 3)

    qh, kh, vh = split(q), split(k), split(v)
    s = jnp.einsum("bhnd,bhmd->bhnm", qh, kh)
    a = jax.nn.softmax(s, axis=-1)
    o = jnp.einsum("bhnm,bhmd->bhnd", a, vh)
    o = o.transpose(0, 2, 1, 3).reshape(B * N, D)
    attn = o @ p["wo"] + p["bo"]

    def ln(t, g, b_):
        m = jnp.mean(t, axis=-1, keepdims=True)
        vv = jnp.mean(jnp.square(t - m), axis=-1, keepdims=True)
        return (t - m) * lax.rsqrt(vv + EPS) * g + b_

    y = ln(x + attn, p["ln1_g"], p["ln1_b"])
    f = jnp.maximum(y @ p["w1"] + p["b1"], 0.0) @ p["w2"] + p["b2"]
    z = ln(y + f, p["ln2_g"], p["ln2_b"])
    return z.reshape(B, N, D).transpose(0, 2, 1)


# ------------------------------ parameter init ------------------------------

def init_params(key):
    def dense(k, shape, scale=0.05):
        return (scale * jax.random.normal(k, shape)).astype(jnp.float32)

    ks = jax.random.split(key, 8)
    return {
        # weights stored (in, out) so the kernel never transposes
        "wqkv": dense(ks[0], (D_MODEL, 3 * D_MODEL)),
        "bqkv": dense(ks[1], (1, 3 * D_MODEL)),
        "wo":   dense(ks[2], (D_MODEL, D_MODEL)),
        "bo":   dense(ks[3], (1, D_MODEL)),
        "w1":   dense(ks[4], (D_MODEL, DIM_FF)),
        "b1":   dense(ks[5], (1, DIM_FF)),
        "w2":   dense(ks[6], (DIM_FF, D_MODEL)),
        "b2":   dense(ks[7], (1, D_MODEL)),
        "ln1_g": jnp.ones((1, D_MODEL), jnp.float32),
        "ln1_b": jnp.zeros((1, D_MODEL), jnp.float32),
        "ln2_g": jnp.ones((1, D_MODEL), jnp.float32),
        "ln2_b": jnp.zeros((1, D_MODEL), jnp.float32),
    }


def fold_q_scale(p):
    """Fold the 1/sqrt(head_dim) attention scale into the Q weight columns AND
    the Q bias entries (one-time, zero runtime cost)."""
    scale = jnp.float32(HEAD_DIM ** -0.5)
    q = dict(p)
    q["wqkv"] = p["wqkv"].at[:, :D_MODEL].multiply(scale)
    q["bqkv"] = p["bqkv"].at[:, :D_MODEL].multiply(scale)
    return q


# ----------------------------------- main -----------------------------------

if __name__ == "__main__":
    key = jax.random.PRNGKey(0)
    k_src, k_par = jax.random.split(key, 2)

    src = jax.random.normal(k_src, (BATCH, D_MODEL, SEQ), jnp.float32)  # (B, C, N)
    params = init_params(k_par)
    kernel_params = fold_q_scale(params)        # Q scale folded once, offline

    out = jax.block_until_ready(encoder_layer_forward(src, kernel_params))
    ref = jax.block_until_ready(encoder_layer_reference(src, params))

    assert out.shape == (BATCH, D_MODEL, SEQ), out.shape
    assert bool(jnp.all(jnp.isfinite(out)))
    assert bool(jnp.allclose(out, ref, atol=1e-4, rtol=1e-4)), \
        float(jnp.max(jnp.abs(out - ref)))
    print("KERNEL_OK")
</pallas_src>

<mosaic_0001>
module attributes {stable_mosaic.version = 11 : i64} {
  func.func @_encoder_layer_kernel(%arg0: i32, %arg1: memref<1x32x16xf32, #tpu.memory_space<vmem>>, %arg2: memref<32x96xf32, #tpu.memory_space<vmem>>, %arg3: memref<1x96xf32, #tpu.memory_space<vmem>>, %arg4: memref<32x32xf32, #tpu.memory_space<vmem>>, %arg5: memref<1x32xf32, #tpu.memory_space<vmem>>, %arg6: memref<1x32xf32, #tpu.memory_space<vmem>>, %arg7: memref<1x32xf32, #tpu.memory_space<vmem>>, %arg8: memref<32x64xf32, #tpu.memory_space<vmem>>, %arg9: memref<1x64xf32, #tpu.memory_space<vmem>>, %arg10: memref<64x32xf32, #tpu.memory_space<vmem>>, %arg11: memref<1x32xf32, #tpu.memory_space<vmem>>, %arg12: memref<1x32xf32, #tpu.memory_space<vmem>>, %arg13: memref<1x32xf32, #tpu.memory_space<vmem>>, %arg14: memref<1x32x16xf32, #tpu.memory_space<vmem>>) attributes {dimension_semantics = [#tpu.dimension_semantics<parallel>], iteration_bounds = array<i64: 2>, scalar_prefetch = 0 : i64, scratch_operands = 0 : i64, tpu.core_type = #tpu.core_type<tc>, window_params = [{transform_indices = @transform_0, window_bounds = array<i64: 1, 32, 16>}, {pipeline_mode = #tpu.pipeline_mode<synchronous>, transform_indices = @transform_1, window_bounds = array<i64: 32, 96>}, {pipeline_mode = #tpu.pipeline_mode<synchronous>, transform_indices = @transform_2, window_bounds = array<i64: 1, 96>}, {pipeline_mode = #tpu.pipeline_mode<synchronous>, transform_indices = @transform_3, window_bounds = array<i64: 32, 32>}, {pipeline_mode = #tpu.pipeline_mode<synchronous>, transform_indices = @transform_4, window_bounds = array<i64: 1, 32>}, {pipeline_mode = #tpu.pipeline_mode<synchronous>, transform_indices = @transform_5, window_bounds = array<i64: 1, 32>}, {pipeline_mode = #tpu.pipeline_mode<synchronous>, transform_indices = @transform_6, window_bounds = array<i64: 1, 32>}, {pipeline_mode = #tpu.pipeline_mode<synchronous>, transform_indices = @transform_7, window_bounds = array<i64: 32, 64>}, {pipeline_mode = #tpu.pipeline_mode<synchronous>, transform_indices = @transform_8, window_bounds = array<i64: 1, 64>}, {pipeline_mode = #tpu.pipeline_mode<synchronous>, transform_indices = @transform_9, window_bounds = array<i64: 64, 32>}, {pipeline_mode = #tpu.pipeline_mode<synchronous>, transform_indices = @transform_10, window_bounds = array<i64: 1, 32>}, {pipeline_mode = #tpu.pipeline_mode<synchronous>, transform_indices = @transform_11, window_bounds = array<i64: 1, 32>}, {pipeline_mode = #tpu.pipeline_mode<synchronous>, transform_indices = @transform_12, window_bounds = array<i64: 1, 32>}, {transform_indices = @transform_13, window_bounds = array<i64: 1, 32, 16>}]} {
    %c0 = arith.constant 0 : index
    %c0_0 = arith.constant 0 : index
    %c0_1 = arith.constant 0 : index
    %0 = vector.load %arg1[%c0, %c0_0, %c0_1] : memref<1x32x16xf32, #tpu.memory_space<vmem>>, vector<1x32x16xf32>
    %1 = vector.shape_cast %0 : vector<1x32x16xf32> to vector<32x16xf32>
    %2 = tpu.transpose %1, [1, 0] : vector<32x16xf32> -> vector<16x32xf32>
    %c0_2 = arith.constant 0 : index
    %c0_3 = arith.constant 0 : index
    %3 = vector.load %arg2[%c0_2, %c0_3] : memref<32x96xf32, #tpu.memory_space<vmem>>, vector<32x96xf32>
    %cst = arith.constant dense<0.000000e+00> : vector<16x96xf32>
    %4 = tpu.matmul %2, %3, %cst {dimension_numbers = #tpu.dot_dimension_numbers<[1], [0], [0], [1], [0, 0, 1, 1], [], []>} : vector<16x32xf32>, vector<32x96xf32>, vector<16x96xf32> -> vector<16x96xf32>
    %c0_4 = arith.constant 0 : index
    %c0_5 = arith.constant 0 : index
    %5 = vector.load %arg3[%c0_4, %c0_5] : memref<1x96xf32, #tpu.memory_space<vmem>>, vector<1x96xf32>
    %6 = vector.broadcast %5 : vector<1x96xf32> to vector<16x96xf32>
    %7 = arith.addf %4, %6 : vector<16x96xf32>
    %8 = vector.extract_strided_slice %7 {offsets = [0, 0], sizes = [16, 32], strides = [1, 1]} : vector<16x96xf32> to vector<16x32xf32>
    %9 = vector.extract_strided_slice %7 {offsets = [0, 32], sizes = [16, 32], strides = [1, 1]} : vector<16x96xf32> to vector<16x32xf32>
    %10 = vector.extract_strided_slice %7 {offsets = [0, 64], sizes = [16, 32], strides = [1, 1]} : vector<16x96xf32> to vector<16x32xf32>
    %11 = vector.extract_strided_slice %8 {offsets = [0, 0], sizes = [16, 8], strides = [1, 1]} : vector<16x32xf32> to vector<16x8xf32>
    %12 = vector.extract_strided_slice %9 {offsets = [0, 0], sizes = [16, 8], strides = [1, 1]} : vector<16x32xf32> to vector<16x8xf32>
    %13 = vector.extract_strided_slice %10 {offsets = [0, 0], sizes = [16, 8], strides = [1, 1]} : vector<16x32xf32> to vector<16x8xf32>
    %cst_6 = arith.constant dense<0.000000e+00> : vector<16x16xf32>
    %14 = tpu.matmul %11, %12, %cst_6 {dimension_numbers = #tpu.dot_dimension_numbers<[1], [1], [0], [0], [0, 0, 1, 0], [], []>} : vector<16x8xf32>, vector<16x8xf32>, vector<16x16xf32> -> vector<16x16xf32>
    %cst_7 = arith.constant dense<0xFF800000> : vector<16xf32>
    %15 = vector.multi_reduction <maximumf>, %14, %cst_7 [1] : vector<16x16xf32> to vector<16xf32>
    %16 = vector.shape_cast %15 : vector<16xf32> to vector<16x1xf32>
    %17 = vector.broadcast %16 : vector<16x1xf32> to vector<16x16xf32>
    %18 = arith.subf %14, %17 : vector<16x16xf32>
    %19 = math.exp %18 : vector<16x16xf32>
    %cst_8 = arith.constant dense<0.000000e+00> : vector<16xf32>
    %20 = vector.multi_reduction <add>, %19, %cst_8 [1] : vector<16x16xf32> to vector<16xf32>
    %21 = vector.shape_cast %20 : vector<16xf32> to vector<16x1xf32>
    %cst_9 = arith.constant dense<0.000000e+00> : vector<16x8xf32>
    %22 = tpu.matmul %19, %13, %cst_9 {dimension_numbers = #tpu.dot_dimension_numbers<[1], [0], [0], [1], [0, 0, 1, 1], [], []>} : vector<16x16xf32>, vector<16x8xf32>, vector<16x8xf32> -> vector<16x8xf32>
    %23 = vector.broadcast %21 : vector<16x1xf32> to vector<16x8xf32>
    %24 = arith.divf %22, %23 : vector<16x8xf32>
    %25 = vector.extract_strided_slice %8 {offsets = [0, 8], sizes = [16, 8], strides = [1, 1]} : vector<16x32xf32> to vector<16x8xf32>
    %26 = vector.extract_strided_slice %9 {offsets = [0, 8], sizes = [16, 8], strides = [1, 1]} : vector<16x32xf32> to vector<16x8xf32>
    %27 = vector.extract_strided_slice %10 {offsets = [0, 8], sizes = [16, 8], strides = [1, 1]} : vector<16x32xf32> to vector<16x8xf32>
    %cst_10 = arith.constant dense<0.000000e+00> : vector<16x16xf32>
    %28 = tpu.matmul %25, %26, %cst_10 {dimension_numbers = #tpu.dot_dimension_numbers<[1], [1], [0], [0], [0, 0, 1, 0], [], []>} : vector<16x8xf32>, vector<16x8xf32>, vector<16x16xf32> -> vector<16x16xf32>
    %cst_11 = arith.constant dense<0xFF800000> : vector<16xf32>
    %29 = vector.multi_reduction <maximumf>, %28, %cst_11 [1] : vector<16x16xf32> to vector<16xf32>
    %30 = vector.shape_cast %29 : vector<16xf32> to vector<16x1xf32>
    %31 = vector.broadcast %30 : vector<16x1xf32> to vector<16x16xf32>
    %32 = arith.subf %28, %31 : vector<16x16xf32>
    %33 = math.exp %32 : vector<16x16xf32>
    %cst_12 = arith.constant dense<0.000000e+00> : vector<16xf32>
    %34 = vector.multi_reduction <add>, %33, %cst_12 [1] : vector<16x16xf32> to vector<16xf32>
    %35 = vector.shape_cast %34 : vector<16xf32> to vector<16x1xf32>
    %cst_13 = arith.constant dense<0.000000e+00> : vector<16x8xf32>
    %36 = tpu.matmul %33, %27, %cst_13 {dimension_numbers = #tpu.dot_dimension_numbers<[1], [0], [0], [1], [0, 0, 1, 1], [], []>} : vector<16x16xf32>, vector<16x8xf32>, vector<16x8xf32> -> vector<16x8xf32>
    %37 = vector.broadcast %35 : vector<16x1xf32> to vector<16x8xf32>
    %38 = arith.divf %36, %37 : vector<16x8xf32>
    %39 = vector.extract_strided_slice %8 {offsets = [0, 16], sizes = [16, 8], strides = [1, 1]} : vector<16x32xf32> to vector<16x8xf32>
    %40 = vector.extract_strided_slice %9 {offsets = [0, 16], sizes = [16, 8], strides = [1, 1]} : vector<16x32xf32> to vector<16x8xf32>
    %41 = vector.extract_strided_slice %10 {offsets = [0, 16], sizes = [16, 8], strides = [1, 1]} : vector<16x32xf32> to vector<16x8xf32>
    %cst_14 = arith.constant dense<0.000000e+00> : vector<16x16xf32>
    %42 = tpu.matmul %39, %40, %cst_14 {dimension_numbers = #tpu.dot_dimension_numbers<[1], [1], [0], [0], [0, 0, 1, 0], [], []>} : vector<16x8xf32>, vector<16x8xf32>, vector<16x16xf32> -> vector<16x16xf32>
    %cst_15 = arith.constant dense<0xFF800000> : vector<16xf32>
    %43 = vector.multi_reduction <maximumf>, %42, %cst_15 [1] : vector<16x16xf32> to vector<16xf32>
    %44 = vector.shape_cast %43 : vector<16xf32> to vector<16x1xf32>
    %45 = vector.broadcast %44 : vector<16x1xf32> to vector<16x16xf32>
    %46 = arith.subf %42, %45 : vector<16x16xf32>
    %47 = math.exp %46 : vector<16x16xf32>
    %cst_16 = arith.constant dense<0.000000e+00> : vector<16xf32>
    %48 = vector.multi_reduction <add>, %47, %cst_16 [1] : vector<16x16xf32> to vector<16xf32>
    %49 = vector.shape_cast %48 : vector<16xf32> to vector<16x1xf32>
    %cst_17 = arith.constant dense<0.000000e+00> : vector<16x8xf32>
    %50 = tpu.matmul %47, %41, %cst_17 {dimension_numbers = #tpu.dot_dimension_numbers<[1], [0], [0], [1], [0, 0, 1, 1], [], []>} : vector<16x16xf32>, vector<16x8xf32>, vector<16x8xf32> -> vector<16x8xf32>
    %51 = vector.broadcast %49 : vector<16x1xf32> to vector<16x8xf32>
    %52 = arith.divf %50, %51 : vector<16x8xf32>
    %53 = vector.extract_strided_slice %8 {offsets = [0, 24], sizes = [16, 8], strides = [1, 1]} : vector<16x32xf32> to vector<16x8xf32>
    %54 = vector.extract_strided_slice %9 {offsets = [0, 24], sizes = [16, 8], strides = [1, 1]} : vector<16x32xf32> to vector<16x8xf32>
    %55 = vector.extract_strided_slice %10 {offsets = [0, 24], sizes = [16, 8], strides = [1, 1]} : vector<16x32xf32> to vector<16x8xf32>
    %cst_18 = arith.constant dense<0.000000e+00> : vector<16x16xf32>
    %56 = tpu.matmul %53, %54, %cst_18 {dimension_numbers = #tpu.dot_dimension_numbers<[1], [1], [0], [0], [0, 0, 1, 0], [], []>} : vector<16x8xf32>, vector<16x8xf32>, vector<16x16xf32> -> vector<16x16xf32>
    %cst_19 = arith.constant dense<0xFF800000> : vector<16xf32>
    %57 = vector.multi_reduction <maximumf>, %56, %cst_19 [1] : vector<16x16xf32> to vector<16xf32>
    %58 = vector.shape_cast %57 : vector<16xf32> to vector<16x1xf32>
    %59 = vector.broadcast %58 : vector<16x1xf32> to vector<16x16xf32>
    %60 = arith.subf %56, %59 : vector<16x16xf32>
    %61 = math.exp %60 : vector<16x16xf32>
    %cst_20 = arith.constant dense<0.000000e+00> : vector<16xf32>
    %62 = vector.multi_reduction <add>, %61, %cst_20 [1] : vector<16x16xf32> to vector<16xf32>
    %63 = vector.shape_cast %62 : vector<16xf32> to vector<16x1xf32>
    %cst_21 = arith.constant dense<0.000000e+00> : vector<16x8xf32>
    %64 = tpu.matmul %61, %55, %cst_21 {dimension_numbers = #tpu.dot_dimension_numbers<[1], [0], [0], [1], [0, 0, 1, 1], [], []>} : vector<16x16xf32>, vector<16x8xf32>, vector<16x8xf32> -> vector<16x8xf32>
    %65 = vector.broadcast %63 : vector<16x1xf32> to vector<16x8xf32>
    %66 = arith.divf %64, %65 : vector<16x8xf32>
    %67 = tpu.concatenate %24, %38, %52, %66 in 1 : vector<16x8xf32>, vector<16x8xf32>, vector<16x8xf32>, vector<16x8xf32> -> vector<16x32xf32>
    %c0_22 = arith.constant 0 : index
    %c0_23 = arith.constant 0 : index
    %68 = vector.load %arg4[%c0_22, %c0_23] : memref<32x32xf32, #tpu.memory_space<vmem>>, vector<32x32xf32>
    %cst_24 = arith.constant dense<0.000000e+00> : vector<16x32xf32>
    %69 = tpu.matmul %67, %68, %cst_24 {dimension_numbers = #tpu.dot_dimension_numbers<[1], [0], [0], [1], [0, 0, 1, 1], [], []>} : vector<16x32xf32>, vector<32x32xf32>, vector<16x32xf32> -> vector<16x32xf32>
    %c0_25 = arith.constant 0 : index
    %c0_26 = arith.constant 0 : index
    %70 = vector.load %arg5[%c0_25, %c0_26] : memref<1x32xf32, #tpu.memory_space<vmem>>, vector<1x32xf32>
    %71 = vector.broadcast %70 : vector<1x32xf32> to vector<16x32xf32>
    %72 = arith.addf %69, %71 : vector<16x32xf32>
    %73 = arith.addf %2, %72 : vector<16x32xf32>
    %cst_27 = arith.constant dense<0.000000e+00> : vector<16xf32>
    %74 = vector.multi_reduction <add>, %73, %cst_27 [1] : vector<16x32xf32> to vector<16xf32>
    %75 = vector.shape_cast %74 : vector<16xf32> to vector<16x1xf32>
    %cst_28 = arith.constant 3.200000e+01 : f32
    %76 = vector.broadcast %cst_28 : f32 to vector<16x1xf32>
    %77 = arith.divf %75, %76 : vector<16x1xf32>
    %78 = vector.broadcast %77 : vector<16x1xf32> to vector<16x32xf32>
    %79 = arith.subf %73, %78 : vector<16x32xf32>
    %80 = arith.mulf %79, %79 : vector<16x32xf32>
    %cst_29 = arith.constant dense<0.000000e+00> : vector<16xf32>
    %81 = vector.multi_reduction <add>, %80, %cst_29 [1] : vector<16x32xf32> to vector<16xf32>
    %82 = vector.shape_cast %81 : vector<16xf32> to vector<16x1xf32>
    %cst_30 = arith.constant 3.200000e+01 : f32
    %83 = vector.broadcast %cst_30 : f32 to vector<16x1xf32>
    %84 = arith.divf %82, %83 : vector<16x1xf32>
    %85 = vector.broadcast %77 : vector<16x1xf32> to vector<16x32xf32>
    %86 = arith.subf %73, %85 : vector<16x32xf32>
    %cst_31 = arith.constant 9.99999974E-6 : f32
    %87 = vector.broadcast %cst_31 : f32 to vector<16x1xf32>
    %88 = arith.addf %84, %87 : vector<16x1xf32>
    %89 = math.rsqrt %88 : vector<16x1xf32>
    %90 = vector.broadcast %89 : vector<16x1xf32> to vector<16x32xf32>
    %91 = arith.mulf %86, %90 : vector<16x32xf32>
    %c0_32 = arith.constant 0 : index
    %c0_33 = arith.constant 0 : index
    %92 = vector.load %arg6[%c0_32, %c0_33] : memref<1x32xf32, #tpu.memory_space<vmem>>, vector<1x32xf32>
    %93 = vector.broadcast %92 : vector<1x32xf32> to vector<16x32xf32>
    %94 = arith.mulf %91, %93 : vector<16x32xf32>
    %c0_34 = arith.constant 0 : index
    %c0_35 = arith.constant 0 : index
    %95 = vector.load %arg7[%c0_34, %c0_35] : memref<1x32xf32, #tpu.memory_space<vmem>>, vector<1x32xf32>
    %96 = vector.broadcast %95 : vector<1x32xf32> to vector<16x32xf32>
    %97 = arith.addf %94, %96 : vector<16x32xf32>
    %c0_36 = arith.constant 0 : index
    %c0_37 = arith.constant 0 : index
    %98 = vector.load %arg8[%c0_36, %c0_37] : memref<32x64xf32, #tpu.memory_space<vmem>>, vector<32x64xf32>
    %cst_38 = arith.constant dense<0.000000e+00> : vector<16x64xf32>
    %99 = tpu.matmul %97, %98, %cst_38 {dimension_numbers = #tpu.dot_dimension_numbers<[1], [0], [0], [1], [0, 0, 1, 1], [], []>} : vector<16x32xf32>, vector<32x64xf32>, vector<16x64xf32> -> vector<16x64xf32>
    %c0_39 = arith.constant 0 : index
    %c0_40 = arith.constant 0 : index
    %100 = vector.load %arg9[%c0_39, %c0_40] : memref<1x64xf32, #tpu.memory_space<vmem>>, vector<1x64xf32>
    %101 = vector.broadcast %100 : vector<1x64xf32> to vector<16x64xf32>
    %102 = arith.addf %99, %101 : vector<16x64xf32>
    %cst_41 = arith.constant 0.000000e+00 : f32
    %103 = vector.broadcast %cst_41 : f32 to vector<16x64xf32>
    %104 = arith.maximumf %102, %103 : vector<16x64xf32>
    %c0_42 = arith.constant 0 : index
    %c0_43 = arith.constant 0 : index
    %105 = vector.load %arg10[%c0_42, %c0_43] : memref<64x32xf32, #tpu.memory_space<vmem>>, vector<64x32xf32>
    %cst_44 = arith.constant dense<0.000000e+00> : vector<16x32xf32>
    %106 = tpu.matmul %104, %105, %cst_44 {dimension_numbers = #tpu.dot_dimension_numbers<[1], [0], [0], [1], [0, 0, 1, 1], [], []>} : vector<16x64xf32>, vector<64x32xf32>, vector<16x32xf32> -> vector<16x32xf32>
    %c0_45 = arith.constant 0 : index
    %c0_46 = arith.constant 0 : index
    %107 = vector.load %arg11[%c0_45, %c0_46] : memref<1x32xf32, #tpu.memory_space<vmem>>, vector<1x32xf32>
    %108 = vector.broadcast %107 : vector<1x32xf32> to vector<16x32xf32>
    %109 = arith.addf %106, %108 : vector<16x32xf32>
    %110 = arith.addf %97, %109 : vector<16x32xf32>
    %cst_47 = arith.constant dense<0.000000e+00> : vector<16xf32>
    %111 = vector.multi_reduction <add>, %110, %cst_47 [1] : vector<16x32xf32> to vector<16xf32>
    %112 = vector.shape_cast %111 : vector<16xf32> to vector<16x1xf32>
    %cst_48 = arith.constant 3.200000e+01 : f32
    %113 = vector.broadcast %cst_48 : f32 to vector<16x1xf32>
    %114 = arith.divf %112, %113 : vector<16x1xf32>
    %115 = vector.broadcast %114 : vector<16x1xf32> to vector<16x32xf32>
    %116 = arith.subf %110, %115 : vector<16x32xf32>
    %117 = arith.mulf %116, %116 : vector<16x32xf32>
    %cst_49 = arith.constant dense<0.000000e+00> : vector<16xf32>
    %118 = vector.multi_reduction <add>, %117, %cst_49 [1] : vector<16x32xf32> to vector<16xf32>
    %119 = vector.shape_cast %118 : vector<16xf32> to vector<16x1xf32>
    %cst_50 = arith.constant 3.200000e+01 : f32
    %120 = vector.broadcast %cst_50 : f32 to vector<16x1xf32>
    %121 = arith.divf %119, %120 : vector<16x1xf32>
    %122 = vector.broadcast %114 : vector<16x1xf32> to vector<16x32xf32>
    %123 = arith.subf %110, %122 : vector<16x32xf32>
    %cst_51 = arith.constant 9.99999974E-6 : f32
    %124 = vector.broadcast %cst_51 : f32 to vector<16x1xf32>
    %125 = arith.addf %121, %124 : vector<16x1xf32>
    %126 = math.rsqrt %125 : vector<16x1xf32>
    %127 = vector.broadcast %126 : vector<16x1xf32> to vector<16x32xf32>
    %128 = arith.mulf %123, %127 : vector<16x32xf32>
    %c0_52 = arith.constant 0 : index
    %c0_53 = arith.constant 0 : index
    %129 = vector.load %arg12[%c0_52, %c0_53] : memref<1x32xf32, #tpu.memory_space<vmem>>, vector<1x32xf32>
    %130 = vector.broadcast %129 : vector<1x32xf32> to vector<16x32xf32>
    %131 = arith.mulf %128, %130 : vector<16x32xf32>
    %c0_54 = arith.constant 0 : index
    %c0_55 = arith.constant 0 : index
    %132 = vector.load %arg13[%c0_54, %c0_55] : memref<1x32xf32, #tpu.memory_space<vmem>>, vector<1x32xf32>
    %133 = vector.broadcast %132 : vector<1x32xf32> to vector<16x32xf32>
    %134 = arith.addf %131, %133 : vector<16x32xf32>
    %135 = tpu.transpose %134, [1, 0] : vector<16x32xf32> -> vector<32x16xf32>
    %c0_56 = arith.constant 0 : index
    %c0_57 = arith.constant 0 : index
    %c0_58 = arith.constant 0 : index
    %136 = vector.load %arg14[%c0_56, %c0_57, %c0_58] : memref<1x32x16xf32, #tpu.memory_space<vmem>>, vector<1x32x16xf32>
    %137 = vector.shape_cast %136 : vector<1x32x16xf32> to vector<32x16xf32>
    %138 = vector.shape_cast %135 : vector<32x16xf32> to vector<1x32x16xf32>
    tpu.vector_store %arg14[%c0_56, %c0_57, %c0_58], %138 {strides = array<i32>} : memref<1x32x16xf32, #tpu.memory_space<vmem>>, vector<1x32x16xf32>,
    return
  }
  func.func @transform_0(%arg0: i32) -> (i32, i32, i32) {
    %c0_i32 = arith.constant 0 : i32
    %c0_i32_0 = arith.constant 0 : i32
    %c0_i32_1 = arith.constant 0 : i32
    return %arg0, %c0_i32, %c0_i32_0 : i32, i32, i32
  }
  func.func @transform_1(%arg0: i32) -> (i32, i32) {
    %c0_i32 = arith.constant 0 : i32
    %c0_i32_0 = arith.constant 0 : i32
    %c0_i32_1 = arith.constant 0 : i32
    return %c0_i32, %c0_i32_0 : i32, i32
  }
  func.func @transform_2(%arg0: i32) -> (i32, i32) {
    %c0_i32 = arith.constant 0 : i32
    %c0_i32_0 = arith.constant 0 : i32
    %c0_i32_1 = arith.constant 0 : i32
    return %c0_i32, %c0_i32_0 : i32, i32
  }
  func.func @transform_3(%arg0: i32) -> (i32, i32) {
    %c0_i32 = arith.constant 0 : i32
    %c0_i32_0 = arith.constant 0 : i32
    %c0_i32_1 = arith.constant 0 : i32
    return %c0_i32, %c0_i32_0 : i32, i32
  }
  func.func @transform_4(%arg0: i32) -> (i32, i32) {
    %c0_i32 = arith.constant 0 : i32
    %c0_i32_0 = arith.constant 0 : i32
    %c0_i32_1 = arith.constant 0 : i32
    return %c0_i32, %c0_i32_0 : i32, i32
  }
  func.func @transform_5(%arg0: i32) -> (i32, i32) {
    %c0_i32 = arith.constant 0 : i32
    %c0_i32_0 = arith.constant 0 : i32
    %c0_i32_1 = arith.constant 0 : i32
    return %c0_i32, %c0_i32_0 : i32, i32
  }
  func.func @transform_6(%arg0: i32) -> (i32, i32) {
    %c0_i32 = arith.constant 0 : i32
    %c0_i32_0 = arith.constant 0 : i32
    %c0_i32_1 = arith.constant 0 : i32
    return %c0_i32, %c0_i32_0 : i32, i32
  }
  func.func @transform_7(%arg0: i32) -> (i32, i32) {
    %c0_i32 = arith.constant 0 : i32
    %c0_i32_0 = arith.constant 0 : i32
    %c0_i32_1 = arith.constant 0 : i32
    return %c0_i32, %c0_i32_0 : i32, i32
  }
  func.func @transform_8(%arg0: i32) -> (i32, i32) {
    %c0_i32 = arith.constant 0 : i32
    %c0_i32_0 = arith.constant 0 : i32
    %c0_i32_1 = arith.constant 0 : i32
    return %c0_i32, %c0_i32_0 : i32, i32
  }
  func.func @transform_9(%arg0: i32) -> (i32, i32) {
    %c0_i32 = arith.constant 0 : i32
    %c0_i32_0 = arith.constant 0 : i32
    %c0_i32_1 = arith.constant 0 : i32
    return %c0_i32, %c0_i32_0 : i32, i32
  }
  func.func @transform_10(%arg0: i32) -> (i32, i32) {
    %c0_i32 = arith.constant 0 : i32
    %c0_i32_0 = arith.constant 0 : i32
    %c0_i32_1 = arith.constant 0 : i32
    return %c0_i32, %c0_i32_0 : i32, i32
  }
  func.func @transform_11(%arg0: i32) -> (i32, i32) {
    %c0_i32 = arith.constant 0 : i32
    %c0_i32_0 = arith.constant 0 : i32
    %c0_i32_1 = arith.constant 0 : i32
    return %c0_i32, %c0_i32_0 : i32, i32
  }
  func.func @transform_12(%arg0: i32) -> (i32, i32) {
    %c0_i32 = arith.constant 0 : i32
    %c0_i32_0 = arith.constant 0 : i32
    %c0_i32_1 = arith.constant 0 : i32
    return %c0_i32, %c0_i32_0 : i32, i32
  }
  func.func @transform_13(%arg0: i32) -> (i32, i32, i32) {
    %c0_i32 = arith.constant 0 : i32
    %c0_i32_0 = arith.constant 0 : i32
    %c0_i32_1 = arith.constant 0 : i32
    return %arg0, %c0_i32, %c0_i32_0 : i32, i32, i32
  }
}

</mosaic_0001>

<llo_original>
// kernel: encoder_layer_forward.1
$region0: #{encoder_layer_forward.1}
  #allocation0 [shape = 'u32[]', space=smem, size = 0x4, offset = 0x4, fixed_abs, tag = 'smem constant byte address 0x4 - core index']
  #allocation1 [shape = 'u32[144,128]{1,0:T(1,128)}', space=vmem, size = 0x12000, scoped, tag = 'internal scratch']
  %s0 = inlined_call_operand.vmem [shape: f32[2,32,16], index: 0, kind: input, shape index: {}]
  %s1 = inlined_call_operand.vmem [shape: f32[32,96], index: 1, kind: input, shape index: {}]
  %s2 = inlined_call_operand.vmem [shape: f32[1,96], index: 2, kind: input, shape index: {}]
  %s3 = inlined_call_operand.vmem [shape: f32[32,32], index: 3, kind: input, shape index: {}]
  %s4 = inlined_call_operand.vmem [shape: f32[1,32], index: 4, kind: input, shape index: {}]
  %s5 = inlined_call_operand.vmem [shape: f32[1,32], index: 5, kind: input, shape index: {}]
  %s6 = inlined_call_operand.vmem [shape: f32[1,32], index: 6, kind: input, shape index: {}]
  %s7 = inlined_call_operand.vmem [shape: f32[32,64], index: 7, kind: input, shape index: {}]
  %s8 = inlined_call_operand.vmem [shape: f32[1,64], index: 8, kind: input, shape index: {}]
  %s9 = inlined_call_operand.vmem [shape: f32[64,32], index: 9, kind: input, shape index: {}]
  %s10 = inlined_call_operand.vmem [shape: f32[1,32], index: 10, kind: input, shape index: {}]
  %s11 = inlined_call_operand.vmem [shape: f32[1,32], index: 11, kind: input, shape index: {}]
  %s12 = inlined_call_operand.vmem [shape: f32[1,32], index: 12, kind: input, shape index: {}]
  %s13 = inlined_call_operand.vmem [shape: f32[2,32,16], index: 13, kind: output, shape index: {}]
  %s14 = sld [smem:[#allocation0]]
  $region85: #{encoder_layer_forward.1} parent=0
    _
  %s16 = ssub.s32 1, %s14
  %s17 = scalar_select 0, %s16, %s14
  loop: start=0, step=1, limit=4
  $region2: #{encoder_layer_forward.1} parent=0 // loop_pre_header
    _
  $region3: #{encoder_layer_forward.1} parent=0 // loop_header
    %s19 = sphi 0, %s23
    %p20 = scmp.ge.s32.totalorder %s19, 4
    %s29 = sphi 0, %s31
    %s32 = sphi 0, %s29
    %s33 = sphi 0, %s32
    %s49 = sphi 0, %s33
    %s53 = sphi 0, %s53
    %s55 = sphi 0, %s53
    %s56 = sphi 0, %s55
    %s70 = sphi 0, %s56
    %s74 = sphi 0, %s74
    %s76 = sphi 0, %s74
    %s77 = sphi 0, %s76
    %s91 = sphi 0, %s77
    %s95 = sphi 0, %s95
    %s97 = sphi 0, %s95
    %s98 = sphi 0, %s97
    %s112 = sphi 0, %s98
    %s116 = sphi 0, %s116
    %s118 = sphi 0, %s116
    %s119 = sphi 0, %s118
    %s133 = sphi 0, %s119
    %s137 = sphi 0, %s137
    %s139 = sphi 0, %s137
    %s140 = sphi 0, %s139
    %s154 = sphi 0, %s140
    %s158 = sphi 0, %s158
    %s160 = sphi 0, %s158
    %s161 = sphi 0, %s160
    %s175 = sphi 0, %s161
    %s179 = sphi 0, %s179
    %s181 = sphi 0, %s179
    %s182 = sphi 0, %s181
    %s196 = sphi 0, %s182
    %s200 = sphi 0, %s200
    %s202 = sphi 0, %s200
    %s203 = sphi 0, %s202
    %s217 = sphi 0, %s203
    %s221 = sphi 0, %s221
    %s223 = sphi 0, %s221
    %s224 = sphi 0, %s223
    %s238 = sphi 0, %s224
    %s242 = sphi 0, %s242
    %s244 = sphi 0, %s242
    %s245 = sphi 0, %s244
    %s259 = sphi 0, %s245
    %s263 = sphi 0, %s263
    %s265 = sphi 0, %s263
    %s266 = sphi 0, %s265
    %s280 = sphi 0, %s266
    %s284 = sphi 0, %s284
    %s286 = sphi 0, %s284
    %s287 = sphi 0, %s286
    %s301 = sphi 0, %s287
    %s307 = sphi 0, %s309
    %s310 = sphi 0, %s307
    %s311 = sphi 0, %s310
    %s327 = sphi 0, %s311
  $region4: #{encoder_layer_forward.1} parent=0 // loop_header_branch
    %22 = sbr.rel (%p20) target = $region8
  $region5: #{encoder_layer_forward.1} parent=0 // loop_body
    %s24 = ssub.s32 %s19, 1
    %s25 = ssub.s32 %s19, 2
    %s26 = sadd.s32 %s19, 1
    %s27 = ssub.s32 %s19, %s26
    %p28 = scmp.eq.s32.totalorder %s27, 0
    %s30 = sadd.s32 %s29, 1
    %s31 = scalar_select %p28, %s29, %s30
    %p34 = pneg %p28
    %p35 = scmp.eq.s32.totalorder %s19, 1
    %p36 = por %p34, %p35
    %p37 = scmp.ne.s32.totalorder %s29, %s32
    %p38 = scmp.eq.s32.totalorder %s19, 0
    %p39 = por %p37, %p38
    %p40 = scmp.ne.s32.totalorder %s29, %s32
    %p41 = scmp.eq.s32.totalorder %s24, 1
    %p42 = por %p40, %p41
    %p43 = scmp.ne.s32.totalorder %s32, %s33
    %p44 = scmp.eq.s32.totalorder %s24, 0
    %p45 = por %p43, %p44
    %p46 = scmp.ne.s32.totalorder %s32, %s33
    %p47 = scmp.eq.s32.totalorder %s25, 1
    %p48 = por %p46, %p47
    %p50 = scmp.ne.s32.totalorder %s33, %s49
    %p51 = scmp.eq.s32.totalorder %s25, 0
    %p52 = por %p50, %p51
    %s54 = sadd.s32 %s53, 1
    %p57 = scmp.eq.s32.totalorder %s19, 1
    %p58 = scmp.ne.s32.totalorder %s53, %s55
    %p59 = scmp.eq.s32.totalorder %s19, 0
    %p60 = por %p58, %p59
    %p61 = scmp.ne.s32.totalorder %s53, %s55
    %p62 = scmp.eq.s32.totalorder %s24, 1
    %p63 = por %p61, %p62
    %p64 = scmp.ne.s32.totalorder %s55, %s56
    %p65 = scmp.eq.s32.totalorder %s24, 0
    %p66 = por %p64, %p65
    %p67 = scmp.ne.s32.totalorder %s55, %s56
    %p68 = scmp.eq.s32.totalorder %s25, 1
    %p69 = por %p67, %p68
    %p71 = scmp.ne.s32.totalorder %s56, %s70
    %p72 = scmp.eq.s32.totalorder %s25, 0
    %p73 = por %p71, %p72
    %s75 = sadd.s32 %s74, 1
    %p78 = scmp.eq.s32.totalorder %s19, 1
    %p79 = scmp.ne.s32.totalorder %s74, %s76
    %p80 = scmp.eq.s32.totalorder %s19, 0
    %p81 = por %p79, %p80
    %p82 = scmp.ne.s32.totalorder %s74, %s76
    %p83 = scmp.eq.s32.totalorder %s24, 1
    %p84 = por %p82, %p83
    %p85 = scmp.ne.s32.totalorder %s76, %s77
    %p86 = scmp.eq.s32.totalorder %s24, 0
    %p87 = por %p85, %p86
    %p88 = scmp.ne.s32.totalorder %s76, %s77
    %p89 = scmp.eq.s32.totalorder %s25, 1
    %p90 = por %p88, %p89
    %p92 = scmp.ne.s32.totalorder %s77, %s91
    %p93 = scmp.eq.s32.totalorder %s25, 0
    %p94 = por %p92, %p93
    %s96 = sadd.s32 %s95, 1
    %p99 = scmp.eq.s32.totalorder %s19, 1
    %p100 = scmp.ne.s32.totalorder %s95, %s97
    %p101 = scmp.eq.s32.totalorder %s19, 0
    %p102 = por %p100, %p101
    %p103 = scmp.ne.s32.totalorder %s95, %s97
    %p104 = scmp.eq.s32.totalorder %s24, 1
    %p105 = por %p103, %p104
    %p106 = scmp.ne.s32.totalorder %s97, %s98
    %p107 = scmp.eq.s32.totalorder %s24, 0
    %p108 = por %p106, %p107
    %p109 = scmp.ne.s32.totalorder %s97, %s98
    %p110 = scmp.eq.s32.totalorder %s25, 1
    %p111 = por %p109, %p110
    %p113 = scmp.ne.s32.totalorder %s98, %s112
    %p114 = scmp.eq.s32.totalorder %s25, 0
    %p115 = por %p113, %p114
    %s117 = sadd.s32 %s116, 1
    %p120 = scmp.eq.s32.totalorder %s19, 1
    %p121 = scmp.ne.s32.totalorder %s116, %s118
    %p122 = scmp.eq.s32.totalorder %s19, 0
    %p123 = por %p121, %p122
    %p124 = scmp.ne.s32.totalorder %s116, %s118
    %p125 = scmp.eq.s32.totalorder %s24, 1
    %p126 = por %p124, %p125
    %p127 = scmp.ne.s32.totalorder %s118, %s119
    %p128 = scmp.eq.s32.totalorder %s24, 0
    %p129 = por %p127, %p128
    %p130 = scmp.ne.s32.totalorder %s118, %s119
    %p131 = scmp.eq.s32.totalorder %s25, 1
    %p132 = por %p130, %p131
    %p134 = scmp.ne.s32.totalorder %s119, %s133
    %p135 = scmp.eq.s32.totalorder %s25, 0
    %p136 = por %p134, %p135
    %s138 = sadd.s32 %s137, 1
    %p141 = scmp.eq.s32.totalorder %s19, 1
    %p142 = scmp.ne.s32.totalorder %s137, %s139
    %p143 = scmp.eq.s32.totalorder %s19, 0
    %p144 = por %p142, %p143
    %p145 = scmp.ne.s32.totalorder %s137, %s139
    %p146 = scmp.eq.s32.totalorder %s24, 1
    %p147 = por %p145, %p146
    %p148 = scmp.ne.s32.totalorder %s139, %s140
    %p149 = scmp.eq.s32.totalorder %s24, 0
    %p150 = por %p148, %p149
    %p151 = scmp.ne.s32.totalorder %s139, %s140
    %p152 = scmp.eq.s32.totalorder %s25, 1
    %p153 = por %p151, %p152
    %p155 = scmp.ne.s32.totalorder %s140, %s154
    %p156 = scmp.eq.s32.totalorder %s25, 0
    %p157 = por %p155, %p156
    %s159 = sadd.s32 %s158, 1
    %p162 = scmp.eq.s32.totalorder %s19, 1
    %p163 = scmp.ne.s32.totalorder %s158, %s160
    %p164 = scmp.eq.s32.totalorder %s19, 0
    %p165 = por %p163, %p164
    %p166 = scmp.ne.s32.totalorder %s158, %s160
    %p167 = scmp.eq.s32.totalorder %s24, 1
    %p168 = por %p166, %p167
    %p169 = scmp.ne.s32.totalorder %s160, %s161
    %p170 = scmp.eq.s32.totalorder %s24, 0
    %p171 = por %p169, %p170
    %p172 = scmp.ne.s32.totalorder %s160, %s161
    %p173 = scmp.eq.s32.totalorder %s25, 1
    %p174 = por %p172, %p173
    %p176 = scmp.ne.s32.totalorder %s161, %s175
    %p177 = scmp.eq.s32.totalorder %s25, 0
    %p178 = por %p176, %p177
    %s180 = sadd.s32 %s179, 1
    %p183 = scmp.eq.s32.totalorder %s19, 1
    %p184 = scmp.ne.s32.totalorder %s179, %s181
    %p185 = scmp.eq.s32.totalorder %s19, 0
    %p186 = por %p184, %p185
    %p187 = scmp.ne.s32.totalorder %s179, %s181
    %p188 = scmp.eq.s32.totalorder %s24, 1
    %p189 = por %p187, %p188
    %p190 = scmp.ne.s32.totalorder %s181, %s182
    %p191 = scmp.eq.s32.totalorder %s24, 0
    %p192 = por %p190, %p191
    %p193 = scmp.ne.s32.totalorder %s181, %s182
    %p194 = scmp.eq.s32.totalorder %s25, 1
    %p195 = por %p193, %p194
    %p197 = scmp.ne.s32.totalorder %s182, %s196
    %p198 = scmp.eq.s32.totalorder %s25, 0
    %p199 = por %p197, %p198
    %s201 = sadd.s32 %s200, 1
    %p204 = scmp.eq.s32.totalorder %s19, 1
    %p205 = scmp.ne.s32.totalorder %s200, %s202
    %p206 = scmp.eq.s32.totalorder %s19, 0
    %p207 = por %p205, %p206
    %p208 = scmp.ne.s32.totalorder %s200, %s202
    %p209 = scmp.eq.s32.totalorder %s24, 1
    %p210 = por %p208, %p209
    %p211 = scmp.ne.s32.totalorder %s202, %s203
    %p212 = scmp.eq.s32.totalorder %s24, 0
    %p213 = por %p211, %p212
    %p214 = scmp.ne.s32.totalorder %s202, %s203
    %p215 = scmp.eq.s32.totalorder %s25, 1
    %p216 = por %p214, %p215
    %p218 = scmp.ne.s32.totalorder %s203, %s217
    %p219 = scmp.eq.s32.totalorder %s25, 0
    %p220 = por %p218, %p219
    %s222 = sadd.s32 %s221, 1
    %p225 = scmp.eq.s32.totalorder %s19, 1
    %p226 = scmp.ne.s32.totalorder %s221, %s223
    %p227 = scmp.eq.s32.totalorder %s19, 0
    %p228 = por %p226, %p227
    %p229 = scmp.ne.s32.totalorder %s221, %s223
    %p230 = scmp.eq.s32.totalorder %s24, 1
    %p231 = por %p229, %p230
    %p232 = scmp.ne.s32.totalorder %s223, %s224
    %p233 = scmp.eq.s32.totalorder %s24, 0
    %p234 = por %p232, %p233
    %p235 = scmp.ne.s32.totalorder %s223, %s224
    %p236 = scmp.eq.s32.totalorder %s25, 1
    %p237 = por %p235, %p236
    %p239 = scmp.ne.s32.totalorder %s224, %s238
    %p240 = scmp.eq.s32.totalorder %s25, 0
    %p241 = por %p239, %p240
    %s243 = sadd.s32 %s242, 1
    %p246 = scmp.eq.s32.totalorder %s19, 1
    %p247 = scmp.ne.s32.totalorder %s242, %s244
    %p248 = scmp.eq.s32.totalorder %s19, 0
    %p249 = por %p247, %p248
    %p250 = scmp.ne.s32.totalorder %s242, %s244
    %p251 = scmp.eq.s32.totalorder %s24, 1
    %p252 = por %p250, %p251
    %p253 = scmp.ne.s32.totalorder %s244, %s245
    %p254 = scmp.eq.s32.totalorder %s24, 0
    %p255 = por %p253, %p254
    %p256 = scmp.ne.s32.totalorder %s244, %s245
    %p257 = scmp.eq.s32.totalorder %s25, 1
    %p258 = por %p256, %p257
    %p260 = scmp.ne.s32.totalorder %s245, %s259
    %p261 = scmp.eq.s32.totalorder %s25, 0
    %p262 = por %p260, %p261
    %s264 = sadd.s32 %s263, 1
    %p267 = scmp.eq.s32.totalorder %s19, 1
    %p268 = scmp.ne.s32.totalorder %s263, %s265
    %p269 = scmp.eq.s32.totalorder %s19, 0
    %p270 = por %p268, %p269
    %p271 = scmp.ne.s32.totalorder %s263, %s265
    %p272 = scmp.eq.s32.totalorder %s24, 1
    %p273 = por %p271, %p272
    %p274 = scmp.ne.s32.totalorder %s265, %s266
    %p275 = scmp.eq.s32.totalorder %s24, 0
    %p276 = por %p274, %p275
    %p277 = scmp.ne.s32.totalorder %s265, %s266
    %p278 = scmp.eq.s32.totalorder %s25, 1
    %p279 = por %p277, %p278
    %p281 = scmp.ne.s32.totalorder %s266, %s280
    %p282 = scmp.eq.s32.totalorder %s25, 0
    %p283 = por %p281, %p282
    %s285 = sadd.s32 %s284, 1
    %p288 = scmp.eq.s32.totalorder %s19, 1
    %p289 = scmp.ne.s32.totalorder %s284, %s286
    %p290 = scmp.eq.s32.totalorder %s19, 0
    %p291 = por %p289, %p290
    %p292 = scmp.ne.s32.totalorder %s284, %s286
    %p293 = scmp.eq.s32.totalorder %s24, 1
    %p294 = por %p292, %p293
    %p295 = scmp.ne.s32.totalorder %s286, %s287
    %p296 = scmp.eq.s32.totalorder %s24, 0
    %p297 = por %p295, %p296
    %p298 = scmp.ne.s32.totalorder %s286, %s287
    %p299 = scmp.eq.s32.totalorder %s25, 1
    %p300 = por %p298, %p299
    %p302 = scmp.ne.s32.totalorder %s287, %s301
    %p303 = scmp.eq.s32.totalorder %s25, 0
    %p304 = por %p302, %p303
    %s305 = ssub.s32 %s19, %s26
    %p306 = scmp.eq.s32.totalorder %s305, 0
    %s308 = sadd.s32 %s307, 1
    %s309 = scalar_select %p306, %s307, %s308
    %p312 = pneg %p306
    %p313 = scmp.eq.s32.totalorder %s19, 1
    %p314 = por %p312, %p313
    %p315 = scmp.ne.s32.totalorder %s307, %s310
    %p316 = scmp.eq.s32.totalorder %s19, 0
    %p317 = por %p315, %p316
    %p318 = scmp.ne.s32.totalorder %s307, %s310
    %p319 = scmp.eq.s32.totalorder %s24, 1
    %p320 = por %p318, %p319
    %p321 = scmp.ne.s32.totalorder %s310, %s311
    %p322 = scmp.eq.s32.totalorder %s24, 0
    %p323 = por %p321, %p322
    %p324 = scmp.ne.s32.totalorder %s310, %s311
    %p325 = scmp.eq.s32.totalorder %s25, 1
    %p326 = por %p324, %p325
    %p328 = scmp.ne.s32.totalorder %s311, %s327
    %p329 = scmp.eq.s32.totalorder %s25, 0
    %p330 = por %p328, %p329
    %p331 = scmp.le.s32.totalorder 1, %s19
    %p332 = scmp.lt.s32.totalorder %s19, 3
    %p333 = pnand %p331, %p332
    %p334 = pneg %p333
    // Predicated region
    $region9: #{encoder_layer_forward.1} parent=5 // pred_check
      _
    $region10: #{encoder_layer_forward.1} parent=5 // pred_check_branch
      %336 = sbr.rel (%p333) target = $region12
    $region11: #{encoder_layer_forward.1} parent=5 // pred_region
      %s337 = ssub.s32 %s19, 1
      // Predicated region
      $region13: #{encoder_layer_forward.1} parent=11 // pred_check
        %p338 = pneg %p66
      $region14: #{encoder_layer_forward.1} parent=11 // pred_check_branch
        %340 = sbr.rel (%p338) target = $region16
      $region15: #{encoder_layer_forward.1} parent=11 // pred_region
        _
      $region16: #{encoder_layer_forward.1} parent=11 // pred_fallthru
        _
      // Predicated region
      $region17: #{encoder_layer_forward.1} parent=11 // pred_check
        %p341 = pneg %p87
      $region18: #{encoder_layer_forward.1} parent=11 // pred_check_branch
        %343 = sbr.rel (%p341) target = $region20
      $region19: #{encoder_layer_forward.1} parent=11 // pred_region
        _
      $region20: #{encoder_layer_forward.1} parent=11 // pred_fallthru
        _
      // Predicated region
      $region21: #{encoder_layer_forward.1} parent=11 // pred_check
        %p344 = pneg %p108
      $region22: #{encoder_layer_forward.1} parent=11 // pred_check_branch
        %346 = sbr.rel (%p344) target = $region24
      $region23: #{encoder_layer_forward.1} parent=11 // pred_region
        _
      $region24: #{encoder_layer_forward.1} parent=11 // pred_fallthru
        _
      // Predicated region
      $region25: #{encoder_layer_forward.1} parent=11 // pred_check
        %p347 = pneg %p129
      $region26: #{encoder_layer_forward.1} parent=11 // pred_check_branch
        %349 = sbr.rel (%p347) target = $region28
      $region27: #{encoder_layer_forward.1} parent=11 // pred_region
        _
      $region28: #{encoder_layer_forward.1} parent=11 // pred_fallthru
        _
      // Predicated region
      $region29: #{encoder_layer_forward.1} parent=11 // pred_check
        %p350 = pneg %p150
      $region30: #{encoder_layer_forward.1} parent=11 // pred_check_branch
        %352 = sbr.rel (%p350) target = $region32
      $region31: #{encoder_layer_forward.1} parent=11 // pred_region
        _
      $region32: #{encoder_layer_forward.1} parent=11 // pred_fallthru
        _
      // Predicated region
      $region33: #{encoder_layer_forward.1} parent=11 // pred_check
        %p353 = pneg %p171
      $region34: #{encoder_layer_forward.1} parent=11 // pred_check_branch
        %355 = sbr.rel (%p353) target = $region36
      $region35: #{encoder_layer_forward.1} parent=11 // pred_region
        _
      $region36: #{encoder_layer_forward.1} parent=11 // pred_fallthru
        _
      // Predicated region
      $region37: #{encoder_layer_forward.1} parent=11 // pred_check
        %p356 = pneg %p192
      $region38: #{encoder_layer_forward.1} parent=11 // pred_check_branch
        %358 = sbr.rel (%p356) target = $region40
      $region39: #{encoder_layer_forward.1} parent=11 // pred_region
        _
      $region40: #{encoder_layer_forward.1} parent=11 // pred_fallthru
        _
      // Predicated region
      $region41: #{encoder_layer_forward.1} parent=11 // pred_check
        %p359 = pneg %p213
      $region42: #{encoder_layer_forward.1} parent=11 // pred_check_branch
        %361 = sbr.rel (%p359) target = $region44
      $region43: #{encoder_layer_forward.1} parent=11 // pred_region
        _
      $region44: #{encoder_layer_forward.1} parent=11 // pred_fallthru
        _
      // Predicated region
      $region45: #{encoder_layer_forward.1} parent=11 // pred_check
        %p362 = pneg %p234
      $region46: #{encoder_layer_forward.1} parent=11 // pred_check_branch
        %364 = sbr.rel (%p362) target = $region48
      $region47: #{encoder_layer_forward.1} parent=11 // pred_region
        _
      $region48: #{encoder_layer_forward.1} parent=11 // pred_fallthru
        _
      // Predicated region
      $region49: #{encoder_layer_forward.1} parent=11 // pred_check
        %p365 = pneg %p255
      $region50: #{encoder_layer_forward.1} parent=11 // pred_check_branch
        %367 = sbr.rel (%p365) target = $region52
      $region51: #{encoder_layer_forward.1} parent=11 // pred_region
        _
      $region52: #{encoder_layer_forward.1} parent=11 // pred_fallthru
        _
      // Predicated region
      $region53: #{encoder_layer_forward.1} parent=11 // pred_check
        %p368 = pneg %p276
      $region54: #{encoder_layer_forward.1} parent=11 // pred_check_branch
        %370 = sbr.rel (%p368) target = $region56
      $region55: #{encoder_layer_forward.1} parent=11 // pred_region
        _
      $region56: #{encoder_layer_forward.1} parent=11 // pred_fallthru
        _
      // Predicated region
      $region57: #{encoder_layer_forward.1} parent=11 // pred_check
        %p371 = pneg %p297
      $region58: #{encoder_layer_forward.1} parent=11 // pred_check_branch
        %373 = sbr.rel (%p371) target = $region60
      $region59: #{encoder_layer_forward.1} parent=11 // pred_region
        _
      $region60: #{encoder_layer_forward.1} parent=11 // pred_fallthru
        _
    $region12: #{encoder_layer_forward.1} parent=5 // pred_fallthru
      _
    %p374 = scmp.lt.s32.totalorder %s19, 2
    // Predicated region
    $region61: #{encoder_layer_forward.1} parent=5 // pred_check
      %p375 = pneg %p374
    $region62: #{encoder_layer_forward.1} parent=5 // pred_check_branch
      %377 = sbr.rel (%p375) target = $region64
    $region63: #{encoder_layer_forward.1} parent=5 // pred_region
      // Predicated region
      $region65: #{encoder_layer_forward.1} parent=63 // pred_check
        %p378 = pneg %p39
      $region66: #{encoder_layer_forward.1} parent=63 // pred_check_branch
        %380 = sbr.rel (%p378) target = $region68
      $region67: #{encoder_layer_forward.1} parent=63 // pred_region
        %p381 = scmp.lt.s32.totalorder %s19, 1
        %s382 = scalar_select %p381, %s19, 1
        %s383 = smul.addr %s382, 4
        %s384 = smul.addr %s383, 8
        %s385 = scalar_lea.vmem %s0, %s384
      $region68: #{encoder_layer_forward.1} parent=63 // pred_fallthru
        _
    $region64: #{encoder_layer_forward.1} parent=5 // pred_fallthru
      _
    %p386 = scmp.le.s32.totalorder 1, %s19
    %p387 = scmp.lt.s32.totalorder %s19, 3
    %p388 = pnand %p386, %p387
    %p389 = pneg %p388
    // Predicated region
    $region69: #{encoder_layer_forward.1} parent=5 // pred_check
      _
    $region70: #{encoder_layer_forward.1} parent=5 // pred_check_branch
      %391 = sbr.rel (%p388) target = $region72
    $region71: #{encoder_layer_forward.1} parent=5 // pred_region
      %s392 = ssub.s32 %s19, 1
      %p393 = scmp.lt.s32.totalorder %s24, 1
      %s394 = scalar_select %p393, %s24, 1
      %s395 = smul.addr %s394, 4
      %s396 = smul.addr %s395, 8
      %s397 = scalar_lea.vmem %s0, %s396
      %p398 = pneg %p45
      %p399 = pneg %p42
      %p400 = pneg %p66
      %p401 = pneg %p63
      %p402 = pneg %p87
      %p403 = pneg %p84
      %p404 = pneg %p108
      %p405 = pneg %p105
      %p406 = pneg %p129
      %p407 = pneg %p126
      %p408 = pneg %p150
      %p409 = pneg %p147
      %p410 = pneg %p171
      %p411 = pneg %p168
      %p412 = pneg %p192
      %p413 = pneg %p189
      %p414 = pneg %p213
      %p415 = pneg %p210
      %p416 = pneg %p234
      %p417 = pneg %p231
      %p418 = pneg %p255
      %p419 = pneg %p252
      %p420 = pneg %p276
      %p421 = pneg %p273
      %p422 = pneg %p297
      %p423 = pneg %p294
      %p424 = pneg %p323
      %p425 = pneg %p320
      %p426 = scmp.lt.s32.totalorder %s24, 1
      %s427 = scalar_select %p426, %s24, 1
      %s428 = smul.addr %s427, 4
      %s429 = smul.addr %s428, 8
      %s430 = scalar_lea.vmem %s13, %s429
      %p431 = scmp.lt.s32.totalorder %s24, 1
      %s432 = scalar_select %p431, %s24, 1
      %s433 = smul.addr %s432, 4
      %s434 = smul.addr %s433, 8
      %s435 = scalar_lea.vmem %s0, %s434
      %p436 = scmp.lt.s32.totalorder %s24, 1
      %s437 = scalar_select %p436, %s24, 1
      %s438 = smul.addr %s437, 4
      %s439 = smul.addr %s438, 8
      %s440 = scalar_lea.vmem %s13, %s439
      %v441 = vld [vmem:[%s435] sm:$0xff]
      %v442 = vld [vmem:[%s435 + $0x8] sm:$0xff]
      %v443 = vld [vmem:[%s435 + $0x10] sm:$0xff]
      %v444 = vld [vmem:[%s435 + $0x18] sm:$0xff]
      %445 = vxpose.xlu0.b32.start [1/16] %v441, 128
      %446 = vxpose.xlu0.b32.cont [2/16] %v442, 128
      %447 = vxpose.xlu0.b32.cont [3/16] %v443, 128
      %448 = vxpose.xlu0.b32.cont [4/16] %v444, 128
      %449 = vxpose.xlu0.b32.cont [5/16] 0.0, 128
      %450 = vxpose.xlu0.b32.cont [6/16] 0.0, 128
      %451 = vxpose.xlu0.b32.cont [7/16] 0.0, 128
      %452 = vxpose.xlu0.b32.cont [8/16] 0.0, 128
      %453 = vxpose.xlu0.b32.cont [9/16] 0.0, 128
      %454 = vxpose.xlu0.b32.cont [10/16] 0.0, 128
      %455 = vxpose.xlu0.b32.cont [11/16] 0.0, 128
      %456 = vxpose.xlu0.b32.cont [12/16] 0.0, 128
      %457 = vxpose.xlu0.b32.cont [13/16] 0.0, 128
      %458 = vxpose.xlu0.b32.cont [14/16] 0.0, 128
      %459 = vxpose.xlu0.b32.cont [15/16] 0.0, 128
      %460 = vxpose.xlu0.b32.end [16/16] 0.0, 128
      %v461 = vpop.trf.xlu0
      %v462 = vpop.trf.xlu0
      %v463 = vpop.trf.xlu0
      %v464 = vpop.trf.xlu0
      %v465 = vpop.trf.xlu0
      %v466 = vpop.trf.xlu0
      %v467 = vpop.trf.xlu0
      %v468 = vpop.trf.xlu0
      %v469 = vpop.trf.xlu0
      %v470 = vpop.trf.xlu0
      %v471 = vpop.trf.xlu0
      %v472 = vpop.trf.xlu0
      %v473 = vpop.trf.xlu0
      %v474 = vpop.trf.xlu0
      %v475 = vpop.trf.xlu0
      %v476 = vpop.trf.xlu0
      %v477 = vld [vmem:[%s1] sm:$0xff]
      %v478 = vld [vmem:[%s1 + $0x8] sm:$0xff]
      %v479 = vld [vmem:[%s1 + $0x10] sm:$0xff]
      %v480 = vld [vmem:[%s1 + $0x18] sm:$0xff]
      %v481 = vld [vmem:[%s2] sm:$0x1]
      %v483 = vlaneseq
      %v484 = vshrl.u32 %v483, 7
      %v485 = vsub.s32 0, %v484
      %v486 = vrot.slane %v481, %v485
      %vm488 = vcmask 261120
      %v490 = vsel %vm488, %v461, 0
      %v493 = vsel %vm488, %v462, 0
      %495 = vmatprep.subr.mxu0 0.0
      %496 = vmatpush1.msra.mxu0 0.0
      %497 = vmatprep.subr.mxu0 0.0
      %498 = vmatpush1.msra.mxu0 0.0
      %499 = vmatprep.subr.mxu0 0.0
      %500 = vmatpush1.msra.mxu0 0.0
      %501 = vmatprep.subr.mxu0 0.0
      %502 = vmatpush1.msra.mxu0 0.0
      %503 = vmatprep.subr.mxu0 0.0
      %504 = vmatpush1.msra.mxu0 0.0
      %505 = vmatprep.subr.mxu0 0.0
      %506 = vmatpush1.msra.mxu0 0.0
      %507 = vmatprep.subr.mxu0 0.0
      %508 = vmatpush1.msra.mxu0 0.0
      %509 = vmatprep.subr.mxu0 0.0
      %510 = vmatpush1.msra.mxu0 0.0
      %511 = vmatprep.subr.mxu0 0.0
      %512 = vmatpush1.msra.mxu0 0.0
      %513 = vmatprep.subr.mxu0 0.0
      %514 = vmatpush1.msra.mxu0 0.0
      %515 = vmatprep.subr.mxu0 0.0
      %516 = vmatpush1.msra.mxu0 0.0
      %517 = vmatprep.subr.mxu0 0.0
      %518 = vmatpush1.msra.mxu0 0.0
      %519 = vmatprep.subr.mxu0 0.0
      %520 = vmatpush1.msra.mxu0 %v480
      %521 = vmatprep.subr.mxu0 0.0
      %522 = vmatpush1.msra.mxu0 %v479
      %523 = vmatprep.subr.mxu0 0.0
      %524 = vmatpush1.msra.mxu0 %v478
      %525 = vmatprep.subr.mxu0 0.0
      %526 = vmatpush1.msra.mxu0 %v477
      %527 = vmatprep.subr.mxu0 0.0
      %528 = vmatpush2.msra.mxu0 0.0
      %529 = vmatprep.subr.mxu0 0.0
      %530 = vmatpush2.msra.mxu0 0.0
      %531 = vmatprep.subr.mxu0 0.0
      %532 = vmatpush2.msra.mxu0 0.0
      %533 = vmatprep.subr.mxu0 0.0
      %534 = vmatpush2.msra.mxu0 0.0
      %535 = vmatprep.subr.mxu0 0.0
      %536 = vmatpush2.msra.mxu0 0.0
      %537 = vmatprep.subr.mxu0 0.0
      %538 = vmatpush2.msra.mxu0 0.0
      %539 = vmatprep.subr.mxu0 0.0
      %540 = vmatpush2.msra.mxu0 0.0
      %541 = vmatprep.subr.mxu0 0.0
      %542 = vmatpush2.msra.mxu0 0.0
      %543 = vmatprep.subr.mxu0 0.0
      %544 = vmatpush2.msra.mxu0 0.0
      %545 = vmatprep.subr.mxu0 0.0
      %546 = vmatpush2.msra.mxu0 0.0
      %547 = vmatprep.subr.mxu0 0.0
      %548 = vmatpush2.msra.mxu0 0.0
      %549 = vmatprep.subr.mxu0 0.0
      %550 = vmatpush2.msra.mxu0 0.0
      %551 = vmatprep.subr.mxu0 0.0
      %552 = vmatpush2.msra.mxu0 0.0
      %553 = vmatprep.subr.mxu0 0.0
      %554 = vmatpush2.msra.mxu0 0.0
      %555 = vmatprep.subr.mxu0 0.0
      %556 = vmatpush2.msra.mxu0 0.0
      %557 = vmatprep.subr.mxu0 0.0
      %558 = vmatpush2.msra.mxu0 0.0
      %559 = vmatprep.mubr.f32.mxu0 0.0
      %560 = vmatmul.mubr.f32.gmra.mxu0 %v490
      %v561 = vpop.f32.mrf.mxu0
      %v562 = vadd.f32 %v486, %v561
      %v563 = vpop.f32.mrf.mxu0
      %564 = vmatprep.mubr.f32.mxu0 0.0
      %565 = vmatmul.mubr.f32.gmra.mxu0 %v493
      %v566 = vpop.f32.mrf.mxu0
      %v567 = vadd.f32 %v486, %v566
      %v568 = vpop.f32.mrf.mxu0
      %569 = vdwg.mxu0
      %572 = vrot.lane.b32.xlu0 %v562, 96
      %v573 = vpop.permute.xlu0 %572
      %574 = vrot.lane.b32.xlu0 %v567, 96
      %v575 = vpop.permute.xlu0 %574
      %vm576 = vcmask 64512
      %v577 = vsel %vm576, %v562, 0
      %v579 = vsel %vm576, %v567, 0
      %v581 = vsel %vm576, %v573, 0
      %v583 = vsel %vm576, %v575, 0
      %585 = vmatprep.subr.mxu0 0.0
      %586 = vmatpush1.xpose.msra.mxu0 0.0
      %587 = vmatprep.subr.mxu0 0.0
      %588 = vmatpush1.xpose.msra.mxu0 0.0
      %589 = vmatprep.subr.mxu0 0.0
      %590 = vmatpush1.xpose.msra.mxu0 0.0
      %591 = vmatprep.subr.mxu0 0.0
      %592 = vmatpush1.xpose.msra.mxu0 0.0
      %593 = vmatprep.subr.mxu0 0.0
      %594 = vmatpush1.xpose.msra.mxu0 0.0
      %595 = vmatprep.subr.mxu0 0.0
      %596 = vmatpush1.xpose.msra.mxu0 0.0
      %597 = vmatprep.subr.mxu0 0.0
      %598 = vmatpush1.xpose.msra.mxu0 0.0
      %599 = vmatprep.subr.mxu0 0.0
      %600 = vmatpush1.xpose.msra.mxu0 0.0
      %601 = vmatprep.subr.mxu0 0.0
      %602 = vmatpush1.xpose.msra.mxu0 0.0
      %603 = vmatprep.subr.mxu0 0.0
      %604 = vmatpush1.xpose.msra.mxu0 0.0
      %605 = vmatprep.subr.mxu0 0.0
      %606 = vmatpush1.xpose.msra.mxu0 0.0
      %607 = vmatprep.subr.mxu0 0.0
      %608 = vmatpush1.xpose.msra.mxu0 0.0
      %609 = vmatprep.subr.mxu0 0.0
      %610 = vmatpush1.xpose.msra.mxu0 0.0
      %611 = vmatprep.subr.mxu0 0.0
      %612 = vmatpush1.xpose.msra.mxu0 0.0
      %613 = vmatprep.subr.mxu0 0.0
      %614 = vmatpush1.xpose.msra.mxu0 %v583
      %615 = vmatprep.subr.mxu0 0.0
      %616 = vmatpush1.xpose.msra.mxu0 %v581
      %617 = vmatprep.subr.mxu0 0.0
      %618 = vmatpush2.xpose.msra.mxu0 0.0
      %619 = vmatprep.subr.mxu0 0.0
      %620 = vmatpush2.xpose.msra.mxu0 0.0
      %621 = vmatprep.subr.mxu0 0.0
      %622 = vmatpush2.xpose.msra.mxu0 0.0
      %623 = vmatprep.subr.mxu0 0.0
      %624 = vmatpush2.xpose.msra.mxu0 0.0
      %625 = vmatprep.subr.mxu0 0.0
      %626 = vmatpush2.xpose.msra.mxu0 0.0
      %627 = vmatprep.subr.mxu0 0.0
      %628 = vmatpush2.xpose.msra.mxu0 0.0
      %629 = vmatprep.subr.mxu0 0.0
      %630 = vmatpush2.xpose.msra.mxu0 0.0
      %631 = vmatprep.subr.mxu0 0.0
      %632 = vmatpush2.xpose.msra.mxu0 0.0
      %633 = vmatprep.subr.mxu0 0.0
      %634 = vmatpush2.xpose.msra.mxu0 0.0
      %635 = vmatprep.subr.mxu0 0.0
      %636 = vmatpush2.xpose.msra.mxu0 0.0
      %637 = vmatprep.subr.mxu0 0.0
      %638 = vmatpush2.xpose.msra.mxu0 0.0
      %639 = vmatprep.subr.mxu0 0.0
      %640 = vmatpush2.xpose.msra.mxu0 0.0
      %641 = vmatprep.subr.mxu0 0.0
      %642 = vmatpush2.xpose.msra.mxu0 0.0
      %643 = vmatprep.subr.mxu0 0.0
      %644 = vmatpush2.xpose.msra.mxu0 0.0
      %645 = vmatprep.subr.mxu0 0.0
      %646 = vmatpush2.xpose.msra.mxu0 0.0
      %647 = vmatprep.subr.mxu0 0.0
      %648 = vmatpush2.xpose.msra.mxu0 0.0
      %649 = vmatprep.mubr.f32.mxu0 0.0
      %650 = vmatmul.mubr.f32.gmra.mxu0 %v577
      %v651 = vpop.f32.mrf.mxu0
      %v652 = vadd.f32 0.0, %v651
      %v653 = vpop.f32.mrf.mxu0
      %654 = vmatprep.mubr.f32.mxu0 0.0
      %655 = vmatmul.mubr.f32.gmra.mxu0 %v579
      %v656 = vpop.f32.mrf.mxu0
      %v657 = vadd.f32 0.0, %v656
      %v658 = vpop.f32.mrf.mxu0
      %659 = vdwg.mxu0
      %vm660 = vcmask 130048
      %v661 = vsel %vm660, %v652, -inf
      %662 = vmax.xlane.f32.xlu0 %v661
      %v663 = vpop.xlane.xlu0 %662
      %v664 = vsel %vm660, %v657, -inf
      %665 = vmax.xlane.f32.xlu0 %v664
      %v666 = vpop.xlane.xlu0 %665
      %v667 = vsub.f32 %v652, %v663
      %v668 = vsub.f32 %v657, %v666
      %v669 = vmul.f32 %v667, 1.442695
      %v670 = vpow.pop %v669
      %v671 = vmul.f32 %v668, 1.442695
      %v672 = vpow.pop %v671
      %v673 = vsel %vm660, %v670, 0.0
      %674 = vadd.xlane.f32.xlu0 %v673
      %v675 = vpop.xlane.xlu0 %674
      %v676 = vsel %vm660, %v672, 0.0
      %677 = vadd.xlane.f32.xlu0 %v676
      %v678 = vpop.xlane.xlu0 %677
      %679 = vrot.lane.b32.xlu0 %v562, 64
      %v680 = vpop.permute.xlu0 %679
      %681 = vrot.lane.b32.xlu0 %v567, 64
      %v682 = vpop.permute.xlu0 %681
      %v686 = vsel %vm660, %v670, 0
      %v689 = vsel %vm660, %v672, 0
      %691 = vmatprep.subr.mxu0 0.0
      %692 = vmatpush1.msra.mxu0 0.0
      %693 = vmatprep.subr.mxu0 0.0
      %694 = vmatpush1.msra.mxu0 0.0
      %695 = vmatprep.subr.mxu0 0.0
      %696 = vmatpush1.msra.mxu0 0.0
      %697 = vmatprep.subr.mxu0 0.0
      %698 = vmatpush1.msra.mxu0 0.0
      %699 = vmatprep.subr.mxu0 0.0
      %700 = vmatpush1.msra.mxu0 0.0
      %701 = vmatprep.subr.mxu0 0.0
      %702 = vmatpush1.msra.mxu0 0.0
      %703 = vmatprep.subr.mxu0 0.0
      %704 = vmatpush1.msra.mxu0 0.0
      %705 = vmatprep.subr.mxu0 0.0
      %706 = vmatpush1.msra.mxu0 0.0
      %707 = vmatprep.subr.mxu0 0.0
      %708 = vmatpush1.msra.mxu0 0.0
      %709 = vmatprep.subr.mxu0 0.0
      %710 = vmatpush1.msra.mxu0 0.0
      %711 = vmatprep.subr.mxu0 0.0
      %712 = vmatpush1.msra.mxu0 0.0
      %713 = vmatprep.subr.mxu0 0.0
      %714 = vmatpush1.msra.mxu0 0.0
      %715 = vmatprep.subr.mxu0 0.0
      %716 = vmatpush1.msra.mxu0 0.0
      %717 = vmatprep.subr.mxu0 0.0
      %718 = vmatpush1.msra.mxu0 0.0
      %719 = vmatprep.subr.mxu0 0.0
      %720 = vmatpush1.msra.mxu0 %v682
      %721 = vmatprep.subr.mxu0 0.0
      %722 = vmatpush1.msra.mxu0 %v680
      %723 = vmatprep.subr.mxu0 0.0
      %724 = vmatpush2.msra.mxu0 0.0
      %725 = vmatprep.subr.mxu0 0.0
      %726 = vmatpush2.msra.mxu0 0.0
      %727 = vmatprep.subr.mxu0 0.0
      %728 = vmatpush2.msra.mxu0 0.0
      %729 = vmatprep.subr.mxu0 0.0
      %730 = vmatpush2.msra.mxu0 0.0
      %731 = vmatprep.subr.mxu0 0.0
      %732 = vmatpush2.msra.mxu0 0.0
      %733 = vmatprep.subr.mxu0 0.0
      %734 = vmatpush2.msra.mxu0 0.0
      %735 = vmatprep.subr.mxu0 0.0
      %736 = vmatpush2.msra.mxu0 0.0
      %737 = vmatprep.subr.mxu0 0.0
      %738 = vmatpush2.msra.mxu0 0.0
      %739 = vmatprep.subr.mxu0 0.0
      %740 = vmatpush2.msra.mxu0 0.0
      %741 = vmatprep.subr.mxu0 0.0
      %742 = vmatpush2.msra.mxu0 0.0
      %743 = vmatprep.subr.mxu0 0.0
      %744 = vmatpush2.msra.mxu0 0.0
      %745 = vmatprep.subr.mxu0 0.0
      %746 = vmatpush2.msra.mxu0 0.0
      %747 = vmatprep.subr.mxu0 0.0
      %748 = vmatpush2.msra.mxu0 0.0
      %749 = vmatprep.subr.mxu0 0.0
      %750 = vmatpush2.msra.mxu0 0.0
      %751 = vmatprep.subr.mxu0 0.0
      %752 = vmatpush2.msra.mxu0 0.0
      %753 = vmatprep.subr.mxu0 0.0
      %754 = vmatpush2.msra.mxu0 0.0
      %755 = vmatprep.mubr.f32.mxu0 0.0
      %756 = vmatmul.mubr.f32.gmra.mxu0 %v686
      %v757 = vpop.f32.mrf.mxu0
      %v758 = vadd.f32 0.0, %v757
      %v759 = vpop.f32.mrf.mxu0
      %760 = vmatprep.mubr.f32.mxu0 0.0
      %761 = vmatmul.mubr.f32.gmra.mxu0 %v689
      %v762 = vpop.f32.mrf.mxu0
      %v763 = vadd.f32 0.0, %v762
      %v764 = vpop.f32.mrf.mxu0
      %765 = vdwg.mxu0
      %v766 = vrcp.pop %v675
      %v767 = vmul.f32 %v758, %v766
      %v768 = vrcp.pop %v678
      %v769 = vmul.f32 %v763, %v768
      %770 = vrot.lane.b32.xlu0 %v562, 120
      %v771 = vpop.permute.xlu0 %770
      %772 = vrot.lane.b32.xlu0 %v567, 120
      %v773 = vpop.permute.xlu0 %772
      %774 = vrot.lane.b32.xlu0 %v562, 88
      %v775 = vpop.permute.xlu0 %774
      %776 = vrot.lane.b32.xlu0 %v567, 88
      %v777 = vpop.permute.xlu0 %776
      %v778 = vsel %vm576, %v771, 0
      %v780 = vsel %vm576, %v773, 0
      %v782 = vsel %vm576, %v775, 0
      %v784 = vsel %vm576, %v777, 0
      %786 = vmatprep.subr.mxu0 0.0
      %787 = vmatpush1.xpose.msra.mxu0 0.0
      %788 = vmatprep.subr.mxu0 0.0
      %789 = vmatpush1.xpose.msra.mxu0 0.0
      %790 = vmatprep.subr.mxu0 0.0
      %791 = vmatpush1.xpose.msra.mxu0 0.0
      %792 = vmatprep.subr.mxu0 0.0
      %793 = vmatpush1.xpose.msra.mxu0 0.0
      %794 = vmatprep.subr.mxu0 0.0
      %795 = vmatpush1.xpose.msra.mxu0 0.0
      %796 = vmatprep.subr.mxu0 0.0
      %797 = vmatpush1.xpose.msra.mxu0 0.0
      %798 = vmatprep.subr.mxu0 0.0
      %799 = vmatpush1.xpose.msra.mxu0 0.0
      %800 = vmatprep.subr.mxu0 0.0
      %801 = vmatpush1.xpose.msra.mxu0 0.0
      %802 = vmatprep.subr.mxu0 0.0
      %803 = vmatpush1.xpose.msra.mxu0 0.0
      %804 = vmatprep.subr.mxu0 0.0
      %805 = vmatpush1.xpose.msra.mxu0 0.0
      %806 = vmatprep.subr.mxu0 0.0
      %807 = vmatpush1.xpose.msra.mxu0 0.0
      %808 = vmatprep.subr.mxu0 0.0
      %809 = vmatpush1.xpose.msra.mxu0 0.0
      %810 = vmatprep.subr.mxu0 0.0
      %811 = vmatpush1.xpose.msra.mxu0 0.0
      %812 = vmatprep.subr.mxu0 0.0
      %813 = vmatpush1.xpose.msra.mxu0 0.0
      %814 = vmatprep.subr.mxu0 0.0
      %815 = vmatpush1.xpose.msra.mxu0 %v784
      %816 = vmatprep.subr.mxu0 0.0
      %817 = vmatpush1.xpose.msra.mxu0 %v782
      %818 = vmatprep.subr.mxu0 0.0
      %819 = vmatpush2.xpose.msra.mxu0 0.0
      %820 = vmatprep.subr.mxu0 0.0
      %821 = vmatpush2.xpose.msra.mxu0 0.0
      %822 = vmatprep.subr.mxu0 0.0
      %823 = vmatpush2.xpose.msra.mxu0 0.0
      %824 = vmatprep.subr.mxu0 0.0
      %825 = vmatpush2.xpose.msra.mxu0 0.0
      %826 = vmatprep.subr.mxu0 0.0
      %827 = vmatpush2.xpose.msra.mxu0 0.0
      %828 = vmatprep.subr.mxu0 0.0
      %829 = vmatpush2.xpose.msra.mxu0 0.0
      %830 = vmatprep.subr.mxu0 0.0
      %831 = vmatpush2.xpose.msra.mxu0 0.0
      %832 = vmatprep.subr.mxu0 0.0
      %833 = vmatpush2.xpose.msra.mxu0 0.0
      %834 = vmatprep.subr.mxu0 0.0
      %835 = vmatpush2.xpose.msra.mxu0 0.0
      %836 = vmatprep.subr.mxu0 0.0
      %837 = vmatpush2.xpose.msra.mxu0 0.0
      %838 = vmatprep.subr.mxu0 0.0
      %839 = vmatpush2.xpose.msra.mxu0 0.0
      %840 = vmatprep.subr.mxu0 0.0
      %841 = vmatpush2.xpose.msra.mxu0 0.0
      %842 = vmatprep.subr.mxu0 0.0
      %843 = vmatpush2.xpose.msra.mxu0 0.0
      %844 = vmatprep.subr.mxu0 0.0
      %845 = vmatpush2.xpose.msra.mxu0 0.0
      %846 = vmatprep.subr.mxu0 0.0
      %847 = vmatpush2.xpose.msra.mxu0 0.0
      %848 = vmatprep.subr.mxu0 0.0
      %849 = vmatpush2.xpose.msra.mxu0 0.0
      %850 = vmatprep.mubr.f32.mxu0 0.0
      %851 = vmatmul.mubr.f32.gmra.mxu0 %v778
      %v852 = vpop.f32.mrf.mxu0
      %v853 = vadd.f32 0.0, %v852
      %v854 = vpop.f32.mrf.mxu0
      %855 = vmatprep.mubr.f32.mxu0 0.0
      %856 = vmatmul.mubr.f32.gmra.mxu0 %v780
      %v857 = vpop.f32.mrf.mxu0
      %v858 = vadd.f32 0.0, %v857
      %v859 = vpop.f32.mrf.mxu0
      %860 = vdwg.mxu0
      %v861 = vsel %vm660, %v853, -inf
      %862 = vmax.xlane.f32.xlu0 %v861
      %v863 = vpop.xlane.xlu0 %862
      %v864 = vsel %vm660, %v858, -inf
      %865 = vmax.xlane.f32.xlu0 %v864
      %v866 = vpop.xlane.xlu0 %865
      %v867 = vsub.f32 %v853, %v863
      %v868 = vsub.f32 %v858, %v866
      %v869 = vmul.f32 %v867, 1.442695
      %v870 = vpow.pop %v869
      %v871 = vmul.f32 %v868, 1.442695
      %v872 = vpow.pop %v871
      %v873 = vsel %vm660, %v870, 0.0
      %874 = vadd.xlane.f32.xlu0 %v873
      %v875 = vpop.xlane.xlu0 %874
      %v876 = vsel %vm660, %v872, 0.0
      %877 = vadd.xlane.f32.xlu0 %v876
      %v878 = vpop.xlane.xlu0 %877
      %879 = vrot.lane.b32.xlu0 %v562, 56
      %v880 = vpop.permute.xlu0 %879
      %881 = vrot.lane.b32.xlu0 %v567, 56
      %v882 = vpop.permute.xlu0 %881
      %v886 = vsel %vm660, %v870, 0
      %v889 = vsel %vm660, %v872, 0
      %891 = vmatprep.subr.mxu0 0.0
      %892 = vmatpush1.msra.mxu0 0.0
      %893 = vmatprep.subr.mxu0 0.0
      %894 = vmatpush1.msra.mxu0 0.0
      %895 = vmatprep.subr.mxu0 0.0
      %896 = vmatpush1.msra.mxu0 0.0
      %897 = vmatprep.subr.mxu0 0.0
      %898 = vmatpush1.msra.mxu0 0.0
      %899 = vmatprep.subr.mxu0 0.0
      %900 = vmatpush1.msra.mxu0 0.0
      %901 = vmatprep.subr.mxu0 0.0
      %902 = vmatpush1.msra.mxu0 0.0
      %903 = vmatprep.subr.mxu0 0.0
      %904 = vmatpush1.msra.mxu0 0.0
      %905 = vmatprep.subr.mxu0 0.0
      %906 = vmatpush1.msra.mxu0 0.0
      %907 = vmatprep.subr.mxu0 0.0
      %908 = vmatpush1.msra.mxu0 0.0
      %909 = vmatprep.subr.mxu0 0.0
      %910 = vmatpush1.msra.mxu0 0.0
      %911 = vmatprep.subr.mxu0 0.0
      %912 = vmatpush1.msra.mxu0 0.0
      %913 = vmatprep.subr.mxu0 0.0
      %914 = vmatpush1.msra.mxu0 0.0
      %915 = vmatprep.subr.mxu0 0.0
      %916 = vmatpush1.msra.mxu0 0.0
      %917 = vmatprep.subr.mxu0 0.0
      %918 = vmatpush1.msra.mxu0 0.0
      %919 = vmatprep.subr.mxu0 0.0
      %920 = vmatpush1.msra.mxu0 %v882
      %921 = vmatprep.subr.mxu0 0.0
      %922 = vmatpush1.msra.mxu0 %v880
      %923 = vmatprep.subr.mxu0 0.0
      %924 = vmatpush2.msra.mxu0 0.0
      %925 = vmatprep.subr.mxu0 0.0
      %926 = vmatpush2.msra.mxu0 0.0
      %927 = vmatprep.subr.mxu0 0.0
      %928 = vmatpush2.msra.mxu0 0.0
      %929 = vmatprep.subr.mxu0 0.0
      %930 = vmatpush2.msra.mxu0 0.0
      %931 = vmatprep.subr.mxu0 0.0
      %932 = vmatpush2.msra.mxu0 0.0
      %933 = vmatprep.subr.mxu0 0.0
      %934 = vmatpush2.msra.mxu0 0.0
      %935 = vmatprep.subr.mxu0 0.0
      %936 = vmatpush2.msra.mxu0 0.0
      %937 = vmatprep.subr.mxu0 0.0
      %938 = vmatpush2.msra.mxu0 0.0
      %939 = vmatprep.subr.mxu0 0.0
      %940 = vmatpush2.msra.mxu0 0.0
      %941 = vmatprep.subr.mxu0 0.0
      %942 = vmatpush2.msra.mxu0 0.0
      %943 = vmatprep.subr.mxu0 0.0
      %944 = vmatpush2.msra.mxu0 0.0
      %945 = vmatprep.subr.mxu0 0.0
      %946 = vmatpush2.msra.mxu0 0.0
      %947 = vmatprep.subr.mxu0 0.0
      %948 = vmatpush2.msra.mxu0 0.0
      %949 = vmatprep.subr.mxu0 0.0
      %950 = vmatpush2.msra.mxu0 0.0
      %951 = vmatprep.subr.mxu0 0.0
      %952 = vmatpush2.msra.mxu0 0.0
      %953 = vmatprep.subr.mxu0 0.0
      %954 = vmatpush2.msra.mxu0 0.0
      %955 = vmatprep.mubr.f32.mxu0 0.0
      %956 = vmatmul.mubr.f32.gmra.mxu0 %v886
      %v957 = vpop.f32.mrf.mxu0
      %v958 = vadd.f32 0.0, %v957
      %v959 = vpop.f32.mrf.mxu0
      %960 = vmatprep.mubr.f32.mxu0 0.0
      %961 = vmatmul.mubr.f32.gmra.mxu0 %v889
      %v962 = vpop.f32.mrf.mxu0
      %v963 = vadd.f32 0.0, %v962
      %v964 = vpop.f32.mrf.mxu0
      %965 = vdwg.mxu0
      %v966 = vrcp.pop %v875
      %v967 = vmul.f32 %v958, %v966
      %v968 = vrcp.pop %v878
      %v969 = vmul.f32 %v963, %v968
      %970 = vrot.lane.b32.xlu0 %v562, 112
      %v971 = vpop.permute.xlu0 %970
      %972 = vrot.lane.b32.xlu0 %v567, 112
      %v973 = vpop.permute.xlu0 %972
      %974 = vrot.lane.b32.xlu0 %v562, 80
      %v975 = vpop.permute.xlu0 %974
      %976 = vrot.lane.b32.xlu0 %v567, 80
      %v977 = vpop.permute.xlu0 %976
      %v978 = vsel %vm576, %v971, 0
      %v980 = vsel %vm576, %v973, 0
      %v982 = vsel %vm576, %v975, 0
      %v984 = vsel %vm576, %v977, 0
      %986 = vmatprep.subr.mxu0 0.0
      %987 = vmatpush1.xpose.msra.mxu0 0.0
      %988 = vmatprep.subr.mxu0 0.0
      %989 = vmatpush1.xpose.msra.mxu0 0.0
      %990 = vmatprep.subr.mxu0 0.0
      %991 = vmatpush1.xpose.msra.mxu0 0.0
      %992 = vmatprep.subr.mxu0 0.0
      %993 = vmatpush1.xpose.msra.mxu0 0.0
      %994 = vmatprep.subr.mxu0 0.0
      %995 = vmatpush1.xpose.msra.mxu0 0.0
      %996 = vmatprep.subr.mxu0 0.0
      %997 = vmatpush1.xpose.msra.mxu0 0.0
      %998 = vmatprep.subr.mxu0 0.0
      %999 = vmatpush1.xpose.msra.mxu0 0.0
      %1000 = vmatprep.subr.mxu0 0.0
      %1001 = vmatpush1.xpose.msra.mxu0 0.0
      %1002 = vmatprep.subr.mxu0 0.0
      %1003 = vmatpush1.xpose.msra.mxu0 0.0
      %1004 = vmatprep.subr.mxu0 0.0
      %1005 = vmatpush1.xpose.msra.mxu0 0.0
      %1006 = vmatprep.subr.mxu0 0.0
      %1007 = vmatpush1.xpose.msra.mxu0 0.0
      %1008 = vmatprep.subr.mxu0 0.0
      %1009 = vmatpush1.xpose.msra.mxu0 0.0
      %1010 = vmatprep.subr.mxu0 0.0
      %1011 = vmatpush1.xpose.msra.mxu0 0.0
      %1012 = vmatprep.subr.mxu0 0.0
      %1013 = vmatpush1.xpose.msra.mxu0 0.0
      %1014 = vmatprep.subr.mxu0 0.0
      %1015 = vmatpush1.xpose.msra.mxu0 %v984
      %1016 = vmatprep.subr.mxu0 0.0
      %1017 = vmatpush1.xpose.msra.mxu0 %v982
      %1018 = vmatprep.subr.mxu0 0.0
      %1019 = vmatpush2.xpose.msra.mxu0 0.0
      %1020 = vmatprep.subr.mxu0 0.0
      %1021 = vmatpush2.xpose.msra.mxu0 0.0
      %1022 = vmatprep.subr.mxu0 0.0
      %1023 = vmatpush2.xpose.msra.mxu0 0.0
      %1024 = vmatprep.subr.mxu0 0.0
      %1025 = vmatpush2.xpose.msra.mxu0 0.0
      %1026 = vmatprep.subr.mxu0 0.0
      %1027 = vmatpush2.xpose.msra.mxu0 0.0
      %1028 = vmatprep.subr.mxu0 0.0
      %1029 = vmatpush2.xpose.msra.mxu0 0.0
      %1030 = vmatprep.subr.mxu0 0.0
      %1031 = vmatpush2.xpose.msra.mxu0 0.0
      %1032 = vmatprep.subr.mxu0 0.0
      %1033 = vmatpush2.xpose.msra.mxu0 0.0
      %1034 = vmatprep.subr.mxu0 0.0
      %1035 = vmatpush2.xpose.msra.mxu0 0.0
      %1036 = vmatprep.subr.mxu0 0.0
      %1037 = vmatpush2.xpose.msra.mxu0 0.0
      %1038 = vmatprep.subr.mxu0 0.0
      %1039 = vmatpush2.xpose.msra.mxu0 0.0
      %1040 = vmatprep.subr.mxu0 0.0
      %1041 = vmatpush2.xpose.msra.mxu0 0.0
      %1042 = vmatprep.subr.mxu0 0.0
      %1043 = vmatpush2.xpose.msra.mxu0 0.0
      %1044 = vmatprep.subr.mxu0 0.0
      %1045 = vmatpush2.xpose.msra.mxu0 0.0
      %1046 = vmatprep.subr.mxu0 0.0
      %1047 = vmatpush2.xpose.msra.mxu0 0.0
      %1048 = vmatprep.subr.mxu0 0.0
      %1049 = vmatpush2.xpose.msra.mxu0 0.0
      %1050 = vmatprep.mubr.f32.mxu0 0.0
      %1051 = vmatmul.mubr.f32.gmra.mxu0 %v978
      %v1052 = vpop.f32.mrf.mxu0
      %v1053 = vadd.f32 0.0, %v1052
      %v1054 = vpop.f32.mrf.mxu0
      %1055 = vmatprep.mubr.f32.mxu0 0.0
      %1056 = vmatmul.mubr.f32.gmra.mxu0 %v980
      %v1057 = vpop.f32.mrf.mxu0
      %v1058 = vadd.f32 0.0, %v1057
      %v1059 = vpop.f32.mrf.mxu0
      %1060 = vdwg.mxu0
      %v1061 = vsel %vm660, %v1053, -inf
      %1062 = vmax.xlane.f32.xlu0 %v1061
      %v1063 = vpop.xlane.xlu0 %1062
      %v1064 = vsel %vm660, %v1058, -inf
      %1065 = vmax.xlane.f32.xlu0 %v1064
      %v1066 = vpop.xlane.xlu0 %1065
      %v1067 = vsub.f32 %v1053, %v1063
      %v1068 = vsub.f32 %v1058, %v1066
      %v1069 = vmul.f32 %v1067, 1.442695
      %v1070 = vpow.pop %v1069
      %v1071 = vmul.f32 %v1068, 1.442695
      %v1072 = vpow.pop %v1071
      %v1073 = vsel %vm660, %v1070, 0.0
      %1074 = vadd.xlane.f32.xlu0 %v1073
      %v1075 = vpop.xlane.xlu0 %1074
      %v1076 = vsel %vm660, %v1072, 0.0
      %1077 = vadd.xlane.f32.xlu0 %v1076
      %v1078 = vpop.xlane.xlu0 %1077
      %1079 = vrot.lane.b32.xlu0 %v562, 48
      %v1080 = vpop.permute.xlu0 %1079
      %1081 = vrot.lane.b32.xlu0 %v567, 48
      %v1082 = vpop.permute.xlu0 %1081
      %v1086 = vsel %vm660, %v1070, 0
      %v1089 = vsel %vm660, %v1072, 0
      %1091 = vmatprep.subr.mxu0 0.0
      %1092 = vmatpush1.msra.mxu0 0.0
      %1093 = vmatprep.subr.mxu0 0.0
      %1094 = vmatpush1.msra.mxu0 0.0
      %1095 = vmatprep.subr.mxu0 0.0
      %1096 = vmatpush1.msra.mxu0 0.0
      %1097 = vmatprep.subr.mxu0 0.0
      %1098 = vmatpush1.msra.mxu0 0.0
      %1099 = vmatprep.subr.mxu0 0.0
      %1100 = vmatpush1.msra.mxu0 0.0
      %1101 = vmatprep.subr.mxu0 0.0
      %1102 = vmatpush1.msra.mxu0 0.0
      %1103 = vmatprep.subr.mxu0 0.0
      %1104 = vmatpush1.msra.mxu0 0.0
      %1105 = vmatprep.subr.mxu0 0.0
      %1106 = vmatpush1.msra.mxu0 0.0
      %1107 = vmatprep.subr.mxu0 0.0
      %1108 = vmatpush1.msra.mxu0 0.0
      %1109 = vmatprep.subr.mxu0 0.0
      %1110 = vmatpush1.msra.mxu0 0.0
      %1111 = vmatprep.subr.mxu0 0.0
      %1112 = vmatpush1.msra.mxu0 0.0
      %1113 = vmatprep.subr.mxu0 0.0
      %1114 = vmatpush1.msra.mxu0 0.0
      %1115 = vmatprep.subr.mxu0 0.0
      %1116 = vmatpush1.msra.mxu0 0.0
      %1117 = vmatprep.subr.mxu0 0.0
      %1118 = vmatpush1.msra.mxu0 0.0
      %1119 = vmatprep.subr.mxu0 0.0
      %1120 = vmatpush1.msra.mxu0 %v1082
      %1121 = vmatprep.subr.mxu0 0.0
      %1122 = vmatpush1.msra.mxu0 %v1080
      %1123 = vmatprep.subr.mxu0 0.0
      %1124 = vmatpush2.msra.mxu0 0.0
      %1125 = vmatprep.subr.mxu0 0.0
      %1126 = vmatpush2.msra.mxu0 0.0
      %1127 = vmatprep.subr.mxu0 0.0
      %1128 = vmatpush2.msra.mxu0 0.0
      %1129 = vmatprep.subr.mxu0 0.0
      %1130 = vmatpush2.msra.mxu0 0.0
      %1131 = vmatprep.subr.mxu0 0.0
      %1132 = vmatpush2.msra.mxu0 0.0
      %1133 = vmatprep.subr.mxu0 0.0
      %1134 = vmatpush2.msra.mxu0 0.0
      %1135 = vmatprep.subr.mxu0 0.0
      %1136 = vmatpush2.msra.mxu0 0.0
      %1137 = vmatprep.subr.mxu0 0.0
      %1138 = vmatpush2.msra.mxu0 0.0
      %1139 = vmatprep.subr.mxu0 0.0
      %1140 = vmatpush2.msra.mxu0 0.0
      %1141 = vmatprep.subr.mxu0 0.0
      %1142 = vmatpush2.msra.mxu0 0.0
      %1143 = vmatprep.subr.mxu0 0.0
      %1144 = vmatpush2.msra.mxu0 0.0
      %1145 = vmatprep.subr.mxu0 0.0
      %1146 = vmatpush2.msra.mxu0 0.0
      %1147 = vmatprep.subr.mxu0 0.0
      %1148 = vmatpush2.msra.mxu0 0.0
      %1149 = vmatprep.subr.mxu0 0.0
      %1150 = vmatpush2.msra.mxu0 0.0
      %1151 = vmatprep.subr.mxu0 0.0
      %1152 = vmatpush2.msra.mxu0 0.0
      %1153 = vmatprep.subr.mxu0 0.0
      %1154 = vmatpush2.msra.mxu0 0.0
      %1155 = vmatprep.mubr.f32.mxu0 0.0
      %1156 = vmatmul.mubr.f32.gmra.mxu0 %v1086
      %v1157 = vpop.f32.mrf.mxu0
      %v1158 = vadd.f32 0.0, %v1157
      %v1159 = vpop.f32.mrf.mxu0
      %1160 = vmatprep.mubr.f32.mxu0 0.0
      %1161 = vmatmul.mubr.f32.gmra.mxu0 %v1089
      %v1162 = vpop.f32.mrf.mxu0
      %v1163 = vadd.f32 0.0, %v1162
      %v1164 = vpop.f32.mrf.mxu0
      %1165 = vdwg.mxu0
      %v1166 = vrcp.pop %v1075
      %v1167 = vmul.f32 %v1158, %v1166
      %v1168 = vrcp.pop %v1078
      %v1169 = vmul.f32 %v1163, %v1168
      %1170 = vrot.lane.b32.xlu0 %v562, 104
      %v1171 = vpop.permute.xlu0 %1170
      %1172 = vrot.lane.b32.xlu0 %v567, 104
      %v1173 = vpop.permute.xlu0 %1172
      %1174 = vrot.lane.b32.xlu0 %v562, 72
      %v1175 = vpop.permute.xlu0 %1174
      %1176 = vrot.lane.b32.xlu0 %v567, 72
      %v1177 = vpop.permute.xlu0 %1176
      %v1178 = vsel %vm576, %v1171, 0
      %v1180 = vsel %vm576, %v1173, 0
      %v1182 = vsel %vm576, %v1175, 0
      %v1184 = vsel %vm576, %v1177, 0
      %1186 = vmatprep.subr.mxu0 0.0
      %1187 = vmatpush1.xpose.msra.mxu0 0.0
      %1188 = vmatprep.subr.mxu0 0.0
      %1189 = vmatpush1.xpose.msra.mxu0 0.0
      %1190 = vmatprep.subr.mxu0 0.0
      %1191 = vmatpush1.xpose.msra.mxu0 0.0
      %1192 = vmatprep.subr.mxu0 0.0
      %1193 = vmatpush1.xpose.msra.mxu0 0.0
      %1194 = vmatprep.subr.mxu0 0.0
      %1195 = vmatpush1.xpose.msra.mxu0 0.0
      %1196 = vmatprep.subr.mxu0 0.0
      %1197 = vmatpush1.xpose.msra.mxu0 0.0
      %1198 = vmatprep.subr.mxu0 0.0
      %1199 = vmatpush1.xpose.msra.mxu0 0.0
      %1200 = vmatprep.subr.mxu0 0.0
      %1201 = vmatpush1.xpose.msra.mxu0 0.0
      %1202 = vmatprep.subr.mxu0 0.0
      %1203 = vmatpush1.xpose.msra.mxu0 0.0
      %1204 = vmatprep.subr.mxu0 0.0
      %1205 = vmatpush1.xpose.msra.mxu0 0.0
      %1206 = vmatprep.subr.mxu0 0.0
      %1207 = vmatpush1.xpose.msra.mxu0 0.0
      %1208 = vmatprep.subr.mxu0 0.0
      %1209 = vmatpush1.xpose.msra.mxu0 0.0
      %1210 = vmatprep.subr.mxu0 0.0
      %1211 = vmatpush1.xpose.msra.mxu0 0.0
      %1212 = vmatprep.subr.mxu0 0.0
      %1213 = vmatpush1.xpose.msra.mxu0 0.0
      %1214 = vmatprep.subr.mxu0 0.0
      %1215 = vmatpush1.xpose.msra.mxu0 %v1184
      %1216 = vmatprep.subr.mxu0 0.0
      %1217 = vmatpush1.xpose.msra.mxu0 %v1182
      %1218 = vmatprep.subr.mxu0 0.0
      %1219 = vmatpush2.xpose.msra.mxu0 0.0
      %1220 = vmatprep.subr.mxu0 0.0
      %1221 = vmatpush2.xpose.msra.mxu0 0.0
      %1222 = vmatprep.subr.mxu0 0.0
      %1223 = vmatpush2.xpose.msra.mxu0 0.0
      %1224 = vmatprep.subr.mxu0 0.0
      %1225 = vmatpush2.xpose.msra.mxu0 0.0
      %1226 = vmatprep.subr.mxu0 0.0
      %1227 = vmatpush2.xpose.msra.mxu0 0.0
      %1228 = vmatprep.subr.mxu0 0.0
      %1229 = vmatpush2.xpose.msra.mxu0 0.0
      %1230 = vmatprep.subr.mxu0 0.0
      %1231 = vmatpush2.xpose.msra.mxu0 0.0
      %1232 = vmatprep.subr.mxu0 0.0
      %1233 = vmatpush2.xpose.msra.mxu0 0.0
      %1234 = vmatprep.subr.mxu0 0.0
      %1235 = vmatpush2.xpose.msra.mxu0 0.0
      %1236 = vmatprep.subr.mxu0 0.0
      %1237 = vmatpush2.xpose.msra.mxu0 0.0
      %1238 = vmatprep.subr.mxu0 0.0
      %1239 = vmatpush2.xpose.msra.mxu0 0.0
      %1240 = vmatprep.subr.mxu0 0.0
      %1241 = vmatpush2.xpose.msra.mxu0 0.0
      %1242 = vmatprep.subr.mxu0 0.0
      %1243 = vmatpush2.xpose.msra.mxu0 0.0
      %1244 = vmatprep.subr.mxu0 0.0
      %1245 = vmatpush2.xpose.msra.mxu0 0.0
      %1246 = vmatprep.subr.mxu0 0.0
      %1247 = vmatpush2.xpose.msra.mxu0 0.0
      %1248 = vmatprep.subr.mxu0 0.0
      %1249 = vmatpush2.xpose.msra.mxu0 0.0
      %1250 = vmatprep.mubr.f32.mxu0 0.0
      %1251 = vmatmul.mubr.f32.gmra.mxu0 %v1178
      %v1252 = vpop.f32.mrf.mxu0
      %v1253 = vadd.f32 0.0, %v1252
      %v1254 = vpop.f32.mrf.mxu0
      %1255 = vmatprep.mubr.f32.mxu0 0.0
      %1256 = vmatmul.mubr.f32.gmra.mxu0 %v1180
      %v1257 = vpop.f32.mrf.mxu0
      %v1258 = vadd.f32 0.0, %v1257
      %v1259 = vpop.f32.mrf.mxu0
      %1260 = vdwg.mxu0
      %v1261 = vsel %vm660, %v1253, -inf
      %1262 = vmax.xlane.f32.xlu0 %v1261
      %v1263 = vpop.xlane.xlu0 %1262
      %v1264 = vsel %vm660, %v1258, -inf
      %1265 = vmax.xlane.f32.xlu0 %v1264
      %v1266 = vpop.xlane.xlu0 %1265
      %v1267 = vsub.f32 %v1253, %v1263
      %v1268 = vsub.f32 %v1258, %v1266
      %v1269 = vmul.f32 %v1267, 1.442695
      %v1270 = vpow.pop %v1269
      %v1271 = vmul.f32 %v1268, 1.442695
      %v1272 = vpow.pop %v1271
      %v1273 = vsel %vm660, %v1270, 0.0
      %1274 = vadd.xlane.f32.xlu0 %v1273
      %v1275 = vpop.xlane.xlu0 %1274
      %v1276 = vsel %vm660, %v1272, 0.0
      %1277 = vadd.xlane.f32.xlu0 %v1276
      %v1278 = vpop.xlane.xlu0 %1277
      %1279 = vrot.lane.b32.xlu0 %v562, 40
      %v1280 = vpop.permute.xlu0 %1279
      %1281 = vrot.lane.b32.xlu0 %v567, 40
      %v1282 = vpop.permute.xlu0 %1281
      %v1286 = vsel %vm660, %v1270, 0
      %v1289 = vsel %vm660, %v1272, 0
      %1291 = vmatprep.subr.mxu0 0.0
      %1292 = vmatpush1.msra.mxu0 0.0
      %1293 = vmatprep.subr.mxu0 0.0
      %1294 = vmatpush1.msra.mxu0 0.0
      %1295 = vmatprep.subr.mxu0 0.0
      %1296 = vmatpush1.msra.mxu0 0.0
      %1297 = vmatprep.subr.mxu0 0.0
      %1298 = vmatpush1.msra.mxu0 0.0
      %1299 = vmatprep.subr.mxu0 0.0
      %1300 = vmatpush1.msra.mxu0 0.0
      %1301 = vmatprep.subr.mxu0 0.0
      %1302 = vmatpush1.msra.mxu0 0.0
      %1303 = vmatprep.subr.mxu0 0.0
      %1304 = vmatpush1.msra.mxu0 0.0
      %1305 = vmatprep.subr.mxu0 0.0
      %1306 = vmatpush1.msra.mxu0 0.0
      %1307 = vmatprep.subr.mxu0 0.0
      %1308 = vmatpush1.msra.mxu0 0.0
      %1309 = vmatprep.subr.mxu0 0.0
      %1310 = vmatpush1.msra.mxu0 0.0
      %1311 = vmatprep.subr.mxu0 0.0
      %1312 = vmatpush1.msra.mxu0 0.0
      %1313 = vmatprep.subr.mxu0 0.0
      %1314 = vmatpush1.msra.mxu0 0.0
      %1315 = vmatprep.subr.mxu0 0.0
      %1316 = vmatpush1.msra.mxu0 0.0
      %1317 = vmatprep.subr.mxu0 0.0
      %1318 = vmatpush1.msra.mxu0 0.0
      %1319 = vmatprep.subr.mxu0 0.0
      %1320 = vmatpush1.msra.mxu0 %v1282
      %1321 = vmatprep.subr.mxu0 0.0
      %1322 = vmatpush1.msra.mxu0 %v1280
      %1323 = vmatprep.subr.mxu0 0.0
      %1324 = vmatpush2.msra.mxu0 0.0
      %1325 = vmatprep.subr.mxu0 0.0
      %1326 = vmatpush2.msra.mxu0 0.0
      %1327 = vmatprep.subr.mxu0 0.0
      %1328 = vmatpush2.msra.mxu0 0.0
      %1329 = vmatprep.subr.mxu0 0.0
      %1330 = vmatpush2.msra.mxu0 0.0
      %1331 = vmatprep.subr.mxu0 0.0
      %1332 = vmatpush2.msra.mxu0 0.0
      %1333 = vmatprep.subr.mxu0 0.0
      %1334 = vmatpush2.msra.mxu0 0.0
      %1335 = vmatprep.subr.mxu0 0.0
      %1336 = vmatpush2.msra.mxu0 0.0
      %1337 = vmatprep.subr.mxu0 0.0
      %1338 = vmatpush2.msra.mxu0 0.0
      %1339 = vmatprep.subr.mxu0 0.0
      %1340 = vmatpush2.msra.mxu0 0.0
      %1341 = vmatprep.subr.mxu0 0.0
      %1342 = vmatpush2.msra.mxu0 0.0
      %1343 = vmatprep.subr.mxu0 0.0
      %1344 = vmatpush2.msra.mxu0 0.0
      %1345 = vmatprep.subr.mxu0 0.0
      %1346 = vmatpush2.msra.mxu0 0.0
      %1347 = vmatprep.subr.mxu0 0.0
      %1348 = vmatpush2.msra.mxu0 0.0
      %1349 = vmatprep.subr.mxu0 0.0
      %1350 = vmatpush2.msra.mxu0 0.0
      %1351 = vmatprep.subr.mxu0 0.0
      %1352 = vmatpush2.msra.mxu0 0.0
      %1353 = vmatprep.subr.mxu0 0.0
      %1354 = vmatpush2.msra.mxu0 0.0
      %1355 = vmatprep.mubr.f32.mxu0 0.0
      %1356 = vmatmul.mubr.f32.gmra.mxu0 %v1286
      %v1357 = vpop.f32.mrf.mxu0
      %v1358 = vadd.f32 0.0, %v1357
      %v1359 = vpop.f32.mrf.mxu0
      %1360 = vmatprep.mubr.f32.mxu0 0.0
      %1361 = vmatmul.mubr.f32.gmra.mxu0 %v1289
      %v1362 = vpop.f32.mrf.mxu0
      %v1363 = vadd.f32 0.0, %v1362
      %v1364 = vpop.f32.mrf.mxu0
      %1365 = vdwg.mxu0
      %v1366 = vrcp.pop %v1275
      %v1367 = vmul.f32 %v1358, %v1366
      %v1368 = vrcp.pop %v1278
      %v1369 = vmul.f32 %v1363, %v1368
      %1372 = vrot.lane.b32.xlu0 %v967, 8
      %v1373 = vpop.permute.xlu0 %1372
      %1374 = vrot.lane.b32.xlu0 %v969, 8
      %v1375 = vpop.permute.xlu0 %1374
      %1380 = vrot.lane.b32.xlu0 %v1167, 16
      %v1381 = vpop.permute.xlu0 %1380
      %1382 = vrot.lane.b32.xlu0 %v1169, 16
      %v1383 = vpop.permute.xlu0 %1382
      %1388 = vrot.lane.b32.xlu0 %v1367, 24
      %v1389 = vpop.permute.xlu0 %1388
      %1390 = vrot.lane.b32.xlu0 %v1369, 24
      %v1391 = vpop.permute.xlu0 %1390
      %v1394 = vsel %vm576, %v767, %v1373
      %v1395 = vsel %vm576, %v769, %v1375
      %v1396 = vsel %vm660, %v1394, %v1381
      %v1397 = vsel %vm660, %v1395, %v1383
      %vm1398 = vcmask 195584
      %v1399 = vsel %vm1398, %v1396, %v1389
      %v1400 = vsel %vm1398, %v1397, %v1391
      %v1401 = vld [vmem:[%s3] sm:$0xff]
      %v1402 = vld [vmem:[%s3 + $0x8] sm:$0xff]
      %v1403 = vld [vmem:[%s3 + $0x10] sm:$0xff]
      %v1404 = vld [vmem:[%s3 + $0x18] sm:$0xff]
      %v1405 = vld [vmem:[%s4] sm:$0x1]
      %v1407 = vlaneseq
      %v1408 = vshrl.u32 %v1407, 7
      %v1409 = vsub.s32 0, %v1408
      %v1410 = vrot.slane %v1405, %v1409
      %v1413 = vsel %vm488, %v1399, 0
      %v1416 = vsel %vm488, %v1400, 0
      %1418 = vmatprep.subr.mxu0 0.0
      %1419 = vmatpush1.msra.mxu0 0.0
      %1420 = vmatprep.subr.mxu0 0.0
      %1421 = vmatpush1.msra.mxu0 0.0
      %1422 = vmatprep.subr.mxu0 0.0
      %1423 = vmatpush1.msra.mxu0 0.0
      %1424 = vmatprep.subr.mxu0 0.0
      %1425 = vmatpush1.msra.mxu0 0.0
      %1426 = vmatprep.subr.mxu0 0.0
      %1427 = vmatpush1.msra.mxu0 0.0
      %1428 = vmatprep.subr.mxu0 0.0
      %1429 = vmatpush1.msra.mxu0 0.0
      %1430 = vmatprep.subr.mxu0 0.0
      %1431 = vmatpush1.msra.mxu0 0.0
      %1432 = vmatprep.subr.mxu0 0.0
      %1433 = vmatpush1.msra.mxu0 0.0
      %1434 = vmatprep.subr.mxu0 0.0
      %1435 = vmatpush1.msra.mxu0 0.0
      %1436 = vmatprep.subr.mxu0 0.0
      %1437 = vmatpush1.msra.mxu0 0.0
      %1438 = vmatprep.subr.mxu0 0.0
      %1439 = vmatpush1.msra.mxu0 0.0
      %1440 = vmatprep.subr.mxu0 0.0
      %1441 = vmatpush1.msra.mxu0 0.0
      %1442 = vmatprep.subr.mxu0 0.0
      %1443 = vmatpush1.msra.mxu0 %v1404
      %1444 = vmatprep.subr.mxu0 0.0
      %1445 = vmatpush1.msra.mxu0 %v1403
      %1446 = vmatprep.subr.mxu0 0.0
      %1447 = vmatpush1.msra.mxu0 %v1402
      %1448 = vmatprep.subr.mxu0 0.0
      %1449 = vmatpush1.msra.mxu0 %v1401
      %1450 = vmatprep.subr.mxu0 0.0
      %1451 = vmatpush2.msra.mxu0 0.0
      %1452 = vmatprep.subr.mxu0 0.0
      %1453 = vmatpush2.msra.mxu0 0.0
      %1454 = vmatprep.subr.mxu0 0.0
      %1455 = vmatpush2.msra.mxu0 0.0
      %1456 = vmatprep.subr.mxu0 0.0
      %1457 = vmatpush2.msra.mxu0 0.0
      %1458 = vmatprep.subr.mxu0 0.0
      %1459 = vmatpush2.msra.mxu0 0.0
      %1460 = vmatprep.subr.mxu0 0.0
      %1461 = vmatpush2.msra.mxu0 0.0
      %1462 = vmatprep.subr.mxu0 0.0
      %1463 = vmatpush2.msra.mxu0 0.0
      %1464 = vmatprep.subr.mxu0 0.0
      %1465 = vmatpush2.msra.mxu0 0.0
      %1466 = vmatprep.subr.mxu0 0.0
      %1467 = vmatpush2.msra.mxu0 0.0
      %1468 = vmatprep.subr.mxu0 0.0
      %1469 = vmatpush2.msra.mxu0 0.0
      %1470 = vmatprep.subr.mxu0 0.0
      %1471 = vmatpush2.msra.mxu0 0.0
      %1472 = vmatprep.subr.mxu0 0.0
      %1473 = vmatpush2.msra.mxu0 0.0
      %1474 = vmatprep.subr.mxu0 0.0
      %1475 = vmatpush2.msra.mxu0 0.0
      %1476 = vmatprep.subr.mxu0 0.0
      %1477 = vmatpush2.msra.mxu0 0.0
      %1478 = vmatprep.subr.mxu0 0.0
      %1479 = vmatpush2.msra.mxu0 0.0
      %1480 = vmatprep.subr.mxu0 0.0
      %1481 = vmatpush2.msra.mxu0 0.0
      %1482 = vmatprep.mubr.f32.mxu0 0.0
      %1483 = vmatmul.mubr.f32.gmra.mxu0 %v1413
      %v1484 = vpop.f32.mrf.mxu0
      %v1485 = vadd.f32 %v1410, %v1484
      %v1486 = vpop.f32.mrf.mxu0
      %1487 = vmatprep.mubr.f32.mxu0 0.0
      %1488 = vmatmul.mubr.f32.gmra.mxu0 %v1416
      %v1489 = vpop.f32.mrf.mxu0
      %v1490 = vadd.f32 %v1410, %v1489
      %v1491 = vpop.f32.mrf.mxu0
      %1492 = vdwg.mxu0
      %v1493 = vadd.f32 %v461, %v1485
      %v1494 = vadd.f32 %v462, %v1490
      %v1495 = vsel %vm488, %v1493, 0.0
      %1496 = vadd.xlane.f32.xlu0 %v1495
      %v1497 = vpop.xlane.xlu0 %1496
      %v1498 = vsel %vm488, %v1494, 0.0
      %1499 = vadd.xlane.f32.xlu0 %v1498
      %v1500 = vpop.xlane.xlu0 %1499
      %v1501 = vrcp.pop 32.0
      %v1502 = vmul.f32 %v1497, %v1501
      %v1503 = vmul.f32 %v1500, %v1501
      %v1504 = vsub.f32 %v1493, %v1502
      %v1505 = vsub.f32 %v1494, %v1503
      %v1506 = vmul.f32 %v1504, %v1504
      %v1507 = vmul.f32 %v1505, %v1505
      %v1508 = vsel %vm488, %v1506, 0.0
      %1509 = vadd.xlane.f32.xlu0 %v1508
      %v1510 = vpop.xlane.xlu0 %1509
      %v1511 = vsel %vm488, %v1507, 0.0
      %1512 = vadd.xlane.f32.xlu0 %v1511
      %v1513 = vpop.xlane.xlu0 %1512
      %v1514 = vmul.f32 %v1510, %v1501
      %v1515 = vmul.f32 %v1513, %v1501
      %v1516 = vadd.f32 %v1514, 1e-05
      %v1517 = vadd.f32 %v1515, 1e-05
      %v1518 = vrsqrt.pop %v1516
      %v1519 = vrsqrt.pop %v1517
      %v1520 = vmul.f32 %v1504, %v1518
      %v1521 = vmul.f32 %v1505, %v1519
      %v1522 = vld [vmem:[%s5] sm:$0x1]
      %v1524 = vlaneseq
      %v1525 = vshrl.u32 %v1524, 7
      %v1526 = vsub.s32 0, %v1525
      %v1527 = vrot.slane %v1522, %v1526
      %v1529 = vmul.f32 %v1520, %v1527
      %v1530 = vmul.f32 %v1521, %v1527
      %v1531 = vld [vmem:[%s6] sm:$0x1]
      %v1533 = vlaneseq
      %v1534 = vshrl.u32 %v1533, 7
      %v1535 = vsub.s32 0, %v1534
      %v1536 = vrot.slane %v1531, %v1535
      %v1538 = vadd.f32 %v1529, %v1536
      %v1539 = vadd.f32 %v1530, %v1536
      %v1540 = vld [vmem:[%s7] sm:$0xff]
      %v1541 = vld [vmem:[%s7 + $0x8] sm:$0xff]
      %v1542 = vld [vmem:[%s7 + $0x10] sm:$0xff]
      %v1543 = vld [vmem:[%s7 + $0x18] sm:$0xff]
      %v1544 = vld [vmem:[%s8] sm:$0x1]
      %v1546 = vlaneseq
      %v1547 = vshrl.u32 %v1546, 7
      %v1548 = vsub.s32 0, %v1547
      %v1549 = vrot.slane %v1544, %v1548
      %v1552 = vsel %vm488, %v1538, 0
      %v1555 = vsel %vm488, %v1539, 0
      %1557 = vmatprep.subr.mxu0 0.0
      %1558 = vmatpush1.msra.mxu0 0.0
      %1559 = vmatprep.subr.mxu0 0.0
      %1560 = vmatpush1.msra.mxu0 0.0
      %1561 = vmatprep.subr.mxu0 0.0
      %1562 = vmatpush1.msra.mxu0 0.0
      %1563 = vmatprep.subr.mxu0 0.0
      %1564 = vmatpush1.msra.mxu0 0.0
      %1565 = vmatprep.subr.mxu0 0.0
      %1566 = vmatpush1.msra.mxu0 0.0
      %1567 = vmatprep.subr.mxu0 0.0
      %1568 = vmatpush1.msra.mxu0 0.0
      %1569 = vmatprep.subr.mxu0 0.0
      %1570 = vmatpush1.msra.mxu0 0.0
      %1571 = vmatprep.subr.mxu0 0.0
      %1572 = vmatpush1.msra.mxu0 0.0
      %1573 = vmatprep.subr.mxu0 0.0
      %1574 = vmatpush1.msra.mxu0 0.0
      %1575 = vmatprep.subr.mxu0 0.0
      %1576 = vmatpush1.msra.mxu0 0.0
      %1577 = vmatprep.subr.mxu0 0.0
      %1578 = vmatpush1.msra.mxu0 0.0
      %1579 = vmatprep.subr.mxu0 0.0
      %1580 = vmatpush1.msra.mxu0 0.0
      %1581 = vmatprep.subr.mxu0 0.0
      %1582 = vmatpush1.msra.mxu0 %v1543
      %1583 = vmatprep.subr.mxu0 0.0
      %1584 = vmatpush1.msra.mxu0 %v1542
      %1585 = vmatprep.subr.mxu0 0.0
      %1586 = vmatpush1.msra.mxu0 %v1541
      %1587 = vmatprep.subr.mxu0 0.0
      %1588 = vmatpush1.msra.mxu0 %v1540
      %1589 = vmatprep.subr.mxu0 0.0
      %1590 = vmatpush2.msra.mxu0 0.0
      %1591 = vmatprep.subr.mxu0 0.0
      %1592 = vmatpush2.msra.mxu0 0.0
      %1593 = vmatprep.subr.mxu0 0.0
      %1594 = vmatpush2.msra.mxu0 0.0
      %1595 = vmatprep.subr.mxu0 0.0
      %1596 = vmatpush2.msra.mxu0 0.0
      %1597 = vmatprep.subr.mxu0 0.0
      %1598 = vmatpush2.msra.mxu0 0.0
      %1599 = vmatprep.subr.mxu0 0.0
      %1600 = vmatpush2.msra.mxu0 0.0
      %1601 = vmatprep.subr.mxu0 0.0
      %1602 = vmatpush2.msra.mxu0 0.0
      %1603 = vmatprep.subr.mxu0 0.0
      %1604 = vmatpush2.msra.mxu0 0.0
      %1605 = vmatprep.subr.mxu0 0.0
      %1606 = vmatpush2.msra.mxu0 0.0
      %1607 = vmatprep.subr.mxu0 0.0
      %1608 = vmatpush2.msra.mxu0 0.0
      %1609 = vmatprep.subr.mxu0 0.0
      %1610 = vmatpush2.msra.mxu0 0.0
      %1611 = vmatprep.subr.mxu0 0.0
      %1612 = vmatpush2.msra.mxu0 0.0
      %1613 = vmatprep.subr.mxu0 0.0
      %1614 = vmatpush2.msra.mxu0 0.0
      %1615 = vmatprep.subr.mxu0 0.0
      %1616 = vmatpush2.msra.mxu0 0.0
      %1617 = vmatprep.subr.mxu0 0.0
      %1618 = vmatpush2.msra.mxu0 0.0
      %1619 = vmatprep.subr.mxu0 0.0
      %1620 = vmatpush2.msra.mxu0 0.0
      %1621 = vmatprep.mubr.f32.mxu0 0.0
      %1622 = vmatmul.mubr.f32.gmra.mxu0 %v1552
      %v1623 = vpop.f32.mrf.mxu0
      %v1624 = vadd.f32 %v1549, %v1623
      %v1625 = vpop.f32.mrf.mxu0
      %1626 = vmatprep.mubr.f32.mxu0 0.0
      %1627 = vmatmul.mubr.f32.gmra.mxu0 %v1555
      %v1628 = vpop.f32.mrf.mxu0
      %v1629 = vadd.f32 %v1549, %v1628
      %v1630 = vpop.f32.mrf.mxu0
      %1631 = vdwg.mxu0
      %v1632 = vmax.f32 %v1624, 0.0
      %v1633 = vmax.f32 %v1629, 0.0
      %v1634 = vld [vmem:[%s9] sm:$0xff]
      %v1635 = vld [vmem:[%s9 + $0x8] sm:$0xff]
      %v1636 = vld [vmem:[%s9 + $0x10] sm:$0xff]
      %v1637 = vld [vmem:[%s9 + $0x18] sm:$0xff]
      %v1638 = vld [vmem:[%s9 + $0x20] sm:$0xff]
      %v1639 = vld [vmem:[%s9 + $0x28] sm:$0xff]
      %v1640 = vld [vmem:[%s9 + $0x30] sm:$0xff]
      %v1641 = vld [vmem:[%s9 + $0x38] sm:$0xff]
      %v1642 = vld [vmem:[%s10] sm:$0x1]
      %v1644 = vlaneseq
      %v1645 = vshrl.u32 %v1644, 7
      %v1646 = vsub.s32 0, %v1645
      %v1647 = vrot.slane %v1642, %v1646
      %vm1649 = vcmask 523264
      %v1651 = vsel %vm1649, %v1632, 0
      %v1654 = vsel %vm1649, %v1633, 0
      %1656 = vmatprep.subr.mxu0 0.0
      %1657 = vmatpush1.msra.mxu0 0.0
      %1658 = vmatprep.subr.mxu0 0.0
      %1659 = vmatpush1.msra.mxu0 0.0
      %1660 = vmatprep.subr.mxu0 0.0
      %1661 = vmatpush1.msra.mxu0 0.0
      %1662 = vmatprep.subr.mxu0 0.0
      %1663 = vmatpush1.msra.mxu0 0.0
      %1664 = vmatprep.subr.mxu0 0.0
      %1665 = vmatpush1.msra.mxu0 0.0
      %1666 = vmatprep.subr.mxu0 0.0
      %1667 = vmatpush1.msra.mxu0 0.0
      %1668 = vmatprep.subr.mxu0 0.0
      %1669 = vmatpush1.msra.mxu0 0.0
      %1670 = vmatprep.subr.mxu0 0.0
      %1671 = vmatpush1.msra.mxu0 0.0
      %1672 = vmatprep.subr.mxu0 0.0
      %1673 = vmatpush1.msra.mxu0 %v1641
      %1674 = vmatprep.subr.mxu0 0.0
      %1675 = vmatpush1.msra.mxu0 %v1640
      %1676 = vmatprep.subr.mxu0 0.0
      %1677 = vmatpush1.msra.mxu0 %v1639
      %1678 = vmatprep.subr.mxu0 0.0
      %1679 = vmatpush1.msra.mxu0 %v1638
      %1680 = vmatprep.subr.mxu0 0.0
      %1681 = vmatpush1.msra.mxu0 %v1637
      %1682 = vmatprep.subr.mxu0 0.0
      %1683 = vmatpush1.msra.mxu0 %v1636
      %1684 = vmatprep.subr.mxu0 0.0
      %1685 = vmatpush1.msra.mxu0 %v1635
      %1686 = vmatprep.subr.mxu0 0.0
      %1687 = vmatpush1.msra.mxu0 %v1634
      %1688 = vmatprep.subr.mxu0 0.0
      %1689 = vmatpush2.msra.mxu0 0.0
      %1690 = vmatprep.subr.mxu0 0.0
      %1691 = vmatpush2.msra.mxu0 0.0
      %1692 = vmatprep.subr.mxu0 0.0
      %1693 = vmatpush2.msra.mxu0 0.0
      %1694 = vmatprep.subr.mxu0 0.0
      %1695 = vmatpush2.msra.mxu0 0.0
      %1696 = vmatprep.subr.mxu0 0.0
      %1697 = vmatpush2.msra.mxu0 0.0
      %1698 = vmatprep.subr.mxu0 0.0
      %1699 = vmatpush2.msra.mxu0 0.0
      %1700 = vmatprep.subr.mxu0 0.0
      %1701 = vmatpush2.msra.mxu0 0.0
      %1702 = vmatprep.subr.mxu0 0.0
      %1703 = vmatpush2.msra.mxu0 0.0
      %1704 = vmatprep.subr.mxu0 0.0
      %1705 = vmatpush2.msra.mxu0 0.0
      %1706 = vmatprep.subr.mxu0 0.0
      %1707 = vmatpush2.msra.mxu0 0.0
      %1708 = vmatprep.subr.mxu0 0.0
      %1709 = vmatpush2.msra.mxu0 0.0
      %1710 = vmatprep.subr.mxu0 0.0
      %1711 = vmatpush2.msra.mxu0 0.0
      %1712 = vmatprep.subr.mxu0 0.0
      %1713 = vmatpush2.msra.mxu0 0.0
      %1714 = vmatprep.subr.mxu0 0.0
      %1715 = vmatpush2.msra.mxu0 0.0
      %1716 = vmatprep.subr.mxu0 0.0
      %1717 = vmatpush2.msra.mxu0 0.0
      %1718 = vmatprep.subr.mxu0 0.0
      %1719 = vmatpush2.msra.mxu0 0.0
      %1720 = vmatprep.mubr.f32.mxu0 0.0
      %1721 = vmatmul.mubr.f32.gmra.mxu0 %v1651
      %v1722 = vpop.f32.mrf.mxu0
      %v1723 = vadd.f32 %v1647, %v1722
      %v1724 = vpop.f32.mrf.mxu0
      %1725 = vmatprep.mubr.f32.mxu0 0.0
      %1726 = vmatmul.mubr.f32.gmra.mxu0 %v1654
      %v1727 = vpop.f32.mrf.mxu0
      %v1728 = vadd.f32 %v1647, %v1727
      %v1729 = vpop.f32.mrf.mxu0
      %1730 = vdwg.mxu0
      %v1731 = vadd.f32 %v1538, %v1723
      %v1732 = vadd.f32 %v1539, %v1728
      %v1733 = vsel %vm488, %v1731, 0.0
      %1734 = vadd.xlane.f32.xlu0 %v1733
      %v1735 = vpop.xlane.xlu0 %1734
      %v1736 = vsel %vm488, %v1732, 0.0
      %1737 = vadd.xlane.f32.xlu0 %v1736
      %v1738 = vpop.xlane.xlu0 %1737
      %v1739 = vmul.f32 %v1735, %v1501
      %v1740 = vmul.f32 %v1738, %v1501
      %v1741 = vsub.f32 %v1731, %v1739
      %v1742 = vsub.f32 %v1732, %v1740
      %v1743 = vmul.f32 %v1741, %v1741
      %v1744 = vmul.f32 %v1742, %v1742
      %v1745 = vsel %vm488, %v1743, 0.0
      %1746 = vadd.xlane.f32.xlu0 %v1745
      %v1747 = vpop.xlane.xlu0 %1746
      %v1748 = vsel %vm488, %v1744, 0.0
      %1749 = vadd.xlane.f32.xlu0 %v1748
      %v1750 = vpop.xlane.xlu0 %1749
      %v1751 = vmul.f32 %v1747, %v1501
      %v1752 = vmul.f32 %v1750, %v1501
      %v1753 = vadd.f32 %v1751, 1e-05
      %v1754 = vadd.f32 %v1752, 1e-05
      %v1755 = vrsqrt.pop %v1753
      %v1756 = vrsqrt.pop %v1754
      %v1757 = vmul.f32 %v1741, %v1755
      %v1758 = vmul.f32 %v1742, %v1756
      %v1759 = vld [vmem:[%s11] sm:$0x1]
      %v1761 = vlaneseq
      %v1762 = vshrl.u32 %v1761, 7
      %v1763 = vsub.s32 0, %v1762
      %v1764 = vrot.slane %v1759, %v1763
      %v1766 = vmul.f32 %v1757, %v1764
      %v1767 = vmul.f32 %v1758, %v1764
      %v1768 = vld [vmem:[%s12] sm:$0x1]
      %v1770 = vlaneseq
      %v1771 = vshrl.u32 %v1770, 7
      %v1772 = vsub.s32 0, %v1771
      %v1773 = vrot.slane %v1768, %v1772
      %v1775 = vadd.f32 %v1766, %v1773
      %v1776 = vadd.f32 %v1767, %v1773
      %1777 = vxpose.xlu0.b32.start [1/16] %v1775, 128
      %1778 = vxpose.xlu0.b32.cont [2/16] %v1776, 128
      %1779 = vxpose.xlu0.b32.cont [3/16] 0.0, 128
      %1780 = vxpose.xlu0.b32.cont [4/16] 0.0, 128
      %1781 = vxpose.xlu0.b32.cont [5/16] 0.0, 128
      %1782 = vxpose.xlu0.b32.cont [6/16] 0.0, 128
      %1783 = vxpose.xlu0.b32.cont [7/16] 0.0, 128
      %1784 = vxpose.xlu0.b32.cont [8/16] 0.0, 128
      %1785 = vxpose.xlu0.b32.cont [9/16] 0.0, 128
      %1786 = vxpose.xlu0.b32.cont [10/16] 0.0, 128
      %1787 = vxpose.xlu0.b32.cont [11/16] 0.0, 128
      %1788 = vxpose.xlu0.b32.cont [12/16] 0.0, 128
      %1789 = vxpose.xlu0.b32.cont [13/16] 0.0, 128
      %1790 = vxpose.xlu0.b32.cont [14/16] 0.0, 128
      %1791 = vxpose.xlu0.b32.cont [15/16] 0.0, 128
      %1792 = vxpose.xlu0.b32.end [16/16] 0.0, 128
      %v1793 = vpop.trf.xlu0
      %v1794 = vpop.trf.xlu0
      %v1795 = vpop.trf.xlu0
      %v1796 = vpop.trf.xlu0
      %v1797 = vpop.trf.xlu0
      %v1798 = vpop.trf.xlu0
      %v1799 = vpop.trf.xlu0
      %v1800 = vpop.trf.xlu0
      %v1801 = vpop.trf.xlu0
      %v1802 = vpop.trf.xlu0
      %v1803 = vpop.trf.xlu0
      %v1804 = vpop.trf.xlu0
      %v1805 = vpop.trf.xlu0
      %v1806 = vpop.trf.xlu0
      %v1807 = vpop.trf.xlu0
      %v1808 = vpop.trf.xlu0
      %1809 = vst.msk [vmem:[%s440] sm:$0xff] %vm660, %v1793
      %1810 = vst.msk [vmem:[%s440 + $0x8] sm:$0xff] %vm660, %v1794
      %1811 = vst.msk [vmem:[%s440 + $0x10] sm:$0xff] %vm660, %v1795
      %1812 = vst.msk [vmem:[%s440 + $0x18] sm:$0xff] %vm660, %v1796
      %p1813 = scmp.lt.s32.totalorder %s24, 1
      %s1814 = scalar_select %p1813, %s24, 1
      %s1815 = smul.addr %s1814, 4
      %s1816 = smul.addr %s1815, 8
      %s1817 = scalar_lea.vmem %s13, %s1816
      // Predicated region
      $region73: #{encoder_layer_forward.1} parent=71 // pred_check
        %p1818 = pneg %p320
      $region74: #{encoder_layer_forward.1} parent=71 // pred_check_branch
        %1820 = sbr.rel (%p1818) target = $region76
      $region75: #{encoder_layer_forward.1} parent=71 // pred_region
        _
      $region76: #{encoder_layer_forward.1} parent=71 // pred_fallthru
        _
    $region72: #{encoder_layer_forward.1} parent=5 // pred_fallthru
      _
    %p1821 = scmp.le.s32.totalorder 2, %s19
    // Predicated region
    $region77: #{encoder_layer_forward.1} parent=5 // pred_check
      %p1822 = pneg %p1821
    $region78: #{encoder_layer_forward.1} parent=5 // pred_check_branch
      %1824 = sbr.rel (%p1822) target = $region80
    $region79: #{encoder_layer_forward.1} parent=5 // pred_region
      %s1825 = ssub.s32 %s19, 2
      // Predicated region
      $region81: #{encoder_layer_forward.1} parent=79 // pred_check
        %p1826 = pneg %p326
      $region82: #{encoder_layer_forward.1} parent=79 // pred_check_branch
        %1828 = sbr.rel (%p1826) target = $region84
      $region83: #{encoder_layer_forward.1} parent=79 // pred_region
        %p1829 = scmp.lt.s32.totalorder %s25, 1
        %s1830 = scalar_select %p1829, %s25, 1
        %s1831 = smul.addr %s1830, 4
        %s1832 = smul.addr %s1831, 8
        %s1833 = scalar_lea.vmem %s13, %s1832
      $region84: #{encoder_layer_forward.1} parent=79 // pred_fallthru
        _
    $region80: #{encoder_layer_forward.1} parent=5 // pred_fallthru
      _
  $region6: #{encoder_layer_forward.1} parent=0 // loop_footer
    %s23 = sadd.s32 1, %s19
  $region7: #{encoder_layer_forward.1} parent=0 // loop_footer_branch
    %18 = sbr.rel target = $region3
  $region8: #{encoder_layer_forward.1} parent=0 // loop_exit
    _

</llo_original>
